<compile_context>
chip_gen: v7x
topology: tpu7x:2x2x1
jax: 0.10.0
libtpu: 0.0.40
codegen_flags: <defaults>
</compile_context>

<pallas_src>
import jax
import jax.numpy as jnp
from jax import lax
from jax.experimental import pallas as pl
from jax.experimental.pallas import tpu as pltpu

LANE = 128


def _round_up(v, m):
    return ((v + m - 1) // m) * m


def _make_kernel(BT, H, W, Cin, Cph, Cout, stride, use_res_connect,
                 has_expand, mxu_dtype, compute_dtype):
    """Builds the fused kernel for one batch-tile block (static shapes)."""
    Ho = (H + 2 - 3) // stride + 1
    Wo = (W + 2 - 3) // stride + 1

    def _zero_halo(hp_ref):
        # Re-zero only the 1-pixel halo every step: the scratch is core-private
        # and persists across grid steps, so a pl.when(pid == 0) one-time init
        # is not megacore-safe.  The interior is fully overwritten below.
        zrow = jnp.zeros((BT, 1, W + 2, Cph), compute_dtype)
        hp_ref[:, 0:1, :, :] = zrow
        hp_ref[:, H + 1:H + 2, :, :] = zrow
        # TODO(synk): fold these two column writes into a full-width interior
        # store once sublane-unaligned concat is available (v5e vst-slot win).
        zcol = jnp.zeros((BT, H, 1, Cph), compute_dtype)
        hp_ref[:, 1:H + 1, 0:1, :] = zcol
        hp_ref[:, 1:H + 1, W + 1:W + 2, :] = zcol

    def _dw_and_project(x_ref, hp_ref, dw_ref, bdw_ref, w2_ref, b2_ref,
                        out_ref):
        # ---- 3x3 depthwise conv, stride s, pad 1 (+BN, ReLU6) --------------
        # 3 row-window ref reads (one per ky); kx shifts are value slices.
        dw_rows = [dw_ref[k, :] for k in range(9)]    # hoisted out of the loop
        acc = None
        for ky in range(3):
            if stride == 1:
                row = hp_ref[:, ky:ky + Ho, :, :]     # (BT, Ho, W+2, Cph)
                taps = [row[:, :, kx:kx + Wo, :] for kx in range(3)]
            else:
                # TODO(synk): stride=2 path uses strided ref reads along the
                # sublane (W) axis; untested on hardware — de-interleave the
                # stage-1 store into even/odd columns before relying on it.
                taps = [hp_ref[:, pl.ds(ky, Ho, stride=stride),
                               pl.ds(kx, Wo, stride=stride), :]
                        for kx in range(3)]
            for kx in range(3):
                term = taps[kx] * dw_rows[ky * 3 + kx]
                acc = term if acc is None else acc + term
        d = jnp.clip(acc.astype(jnp.float32) + bdw_ref[0, :], 0.0, 6.0)

        # ---- 1x1 projection conv (+BN, linear): MXU, f32 accumulate --------
        dm = d.reshape(BT * Ho * Wo, Cph).astype(mxu_dtype)
        o = jnp.dot(dm, w2_ref[...], preferred_element_type=jnp.float32)
        o = (o + b2_ref[...]).reshape(BT, Ho, Wo, Cout)
        if use_res_connect:
            o = o + x_ref[...]        # exact f32 skip, re-read from VMEM block
        out_ref[...] = o.astype(out_ref.dtype)

    if has_expand:
        def kernel(x_ref, w1_ref, b1_ref, dw_ref, bdw_ref, w2_ref, b2_ref,
                   out_ref, hp_ref):
            _zero_halo(hp_ref)
            # ---- 1x1 expansion conv (+BN, ReLU6): M = BT*H*W on the MXU ----
            xm = x_ref[...].reshape(BT * H * W, Cin).astype(mxu_dtype)
            h = jnp.dot(xm, w1_ref[...], preferred_element_type=jnp.float32)
            h = jnp.clip(h + b1_ref[...], 0.0, 6.0)
            # Store straight into the halo'd scratch interior.
            hp_ref[:, 1:H + 1, 1:W + 1, :] = (
                h.reshape(BT, H, W, Cph).astype(compute_dtype))
            _dw_and_project(x_ref, hp_ref, dw_ref, bdw_ref, w2_ref, b2_ref,
                            out_ref)
    else:
        def kernel(x_ref, dw_ref, bdw_ref, w2_ref, b2_ref, out_ref, hp_ref):
            _zero_halo(hp_ref)
            hp_ref[:, 1:H + 1, 1:W + 1, :] = x_ref[...].astype(compute_dtype)
            _dw_and_project(x_ref, hp_ref, dw_ref, bdw_ref, w2_ref, b2_ref,
                            out_ref)

    return kernel, Ho, Wo


def inverted_residual_pallas(x_nchw, params, stride, expand_ratio, *,
                             mxu_dtype=jnp.bfloat16, compute_dtype=None,
                             batch_tile=1):
    """x_nchw: (B, Cin, H, W) f32.  Returns (B, Cout, Ho, Wo) f32."""
    w1f, b1, dwf, bdw, w2f, b2 = params
    B, Cin, H, W = x_nchw.shape
    Ch = dwf.shape[1]
    Cout = w2f.shape[1]
    has_expand = expand_ratio != 1
    use_res_connect = (stride == 1 and Cin == Cout)
    if compute_dtype is None:
        compute_dtype = mxu_dtype       # use jnp.float32 on v5e (no bf16 VALU)

    # Hidden channels lane-padded to 128 only where they live in VMEM (weights
    # + scratch); created by the expansion matmul so HBM never sees the pad.
    if has_expand:
        Cph = _round_up(Ch, LANE)
    else:
        assert Cin == Ch
        Cph = Ch

    BT = batch_tile or B
    assert B % BT == 0
    nb = B // BT

    kernel, Ho, Wo = _make_kernel(BT, H, W, Cin, Cph, Cout, stride,
                                  use_res_connect, has_expand, mxu_dtype,
                                  compute_dtype)

    # NCHW -> NHWC, true Cin, f32 (no pad / cast HBM pass).
    x_nhwc = jnp.transpose(x_nchw, (0, 2, 3, 1))

    dwp = jnp.pad(dwf, ((0, 0), (0, Cph - Ch))).astype(compute_dtype)
    bdwp = jnp.pad(bdw, ((0, 0), (0, Cph - Ch))).astype(jnp.float32)
    w2p = jnp.pad(w2f, ((0, Cph - Ch), (0, 0))).astype(mxu_dtype)
    b2p = b2.astype(jnp.float32)

    x_spec = pl.BlockSpec((BT, H, W, Cin), lambda b: (b, 0, 0, 0))
    common_specs = [
        pl.BlockSpec((9, Cph), lambda b: (0, 0)),     # fused dw weights
        pl.BlockSpec((1, Cph), lambda b: (0, 0)),     # dw BN bias
        pl.BlockSpec((Cph, Cout), lambda b: (0, 0)),  # fused projection weights
        pl.BlockSpec((1, Cout), lambda b: (0, 0)),    # projection BN bias
    ]
    if has_expand:
        w1p = jnp.pad(w1f, ((0, 0), (0, Cph - Ch))).astype(mxu_dtype)
        b1p = jnp.pad(b1, ((0, 0), (0, Cph - Ch))).astype(jnp.float32)
        inputs = (x_nhwc, w1p, b1p, dwp, bdwp, w2p, b2p)
        in_specs = [x_spec,
                    pl.BlockSpec((Cin, Cph), lambda b: (0, 0)),
                    pl.BlockSpec((1, Cph), lambda b: (0, 0))] + common_specs
    else:
        inputs = (x_nhwc, dwp, bdwp, w2p, b2p)
        in_specs = [x_spec] + common_specs

    # VMEM budget: double-buffered x/out blocks + (double-buffered) weights +
    # the halo scratch; clamp to ~85% of physical VMEM (v7x: 64 MiB total).
    f32b = 4
    mxb = jnp.dtype(mxu_dtype).itemsize
    cdb = jnp.dtype(compute_dtype).itemsize
    w_bytes = 9 * Cph * cdb + (Cph + Cout) * f32b + Cph * Cout * mxb
    if has_expand:
        w_bytes += Cin * Cph * mxb + Cph * f32b
    vmem_est = (2 * BT * H * W * Cin * f32b
                + 2 * BT * Ho * Wo * Cout * f32b
                + 2 * w_bytes
                + BT * (H + 2) * (W + 2) * Cph * cdb)
    try:
        cap = int(pltpu.get_tpu_info().vmem_capacity_bytes * 0.85)
    except Exception:
        cap = 48 * 2**20
    vmem_limit = int(min(cap, max(32 * 2**20, int(1.5 * vmem_est))))

    out_nhwc = pl.pallas_call(
        kernel,
        out_shape=jax.ShapeDtypeStruct((B, Ho, Wo, Cout), jnp.float32),
        grid_spec=pltpu.PrefetchScalarGridSpec(
            num_scalar_prefetch=0,
            grid=(nb,),
            in_specs=in_specs,
            out_specs=pl.BlockSpec((BT, Ho, Wo, Cout), lambda b: (b, 0, 0, 0)),
            scratch_shapes=[pltpu.VMEM((BT, H + 2, W + 2, Cph), compute_dtype)],
        ),
        compiler_params=pltpu.CompilerParams(
            dimension_semantics=("parallel",),
            vmem_limit_bytes=vmem_limit),
    )(*inputs)

    return jnp.transpose(out_nhwc, (0, 3, 1, 2))


def _fold_bn(gamma, beta, mean, var, eps=1e-5):
    scale = gamma / jnp.sqrt(var + eps)
    bias = beta - mean * scale
    return scale, bias


def make_params(key, inp, oup, expand_ratio):
    """Deterministic synthetic weights; returns fused kernel params + raw params."""
    hidden = int(round(inp * expand_ratio))
    ks = jax.random.split(key, 6)

    def bn(k, c):
        k1, k2, k3, k4 = jax.random.split(k, 4)
        gamma = 1.0 + 0.1 * jax.random.normal(k1, (c,), jnp.float32)
        beta = 0.1 * jax.random.normal(k2, (c,), jnp.float32)
        mean = 0.1 * jax.random.normal(k3, (c,), jnp.float32)
        var = 0.5 + jnp.abs(jax.random.normal(k4, (c,), jnp.float32)) * 0.5
        return gamma, beta, mean, var

    dw = jax.random.normal(ks[1], (hidden, 1, 3, 3), jnp.float32) * 0.2
    w2 = jax.random.normal(ks[2], (oup, hidden, 1, 1), jnp.float32) * 0.2
    s2, b2 = _fold_bn(*bn(ks[4], hidden))
    s3, b3 = _fold_bn(*bn(ks[5], oup))

    # Fuse eval-mode BN into weights, channels-last layouts for the kernel.
    dwf = (jnp.transpose(dw[:, 0, :, :], (1, 2, 0)) * s2[None, None, :]
           ).reshape(9, hidden)                                       # (9, hidden)
    w2f = jnp.transpose(w2[:, :, 0, 0], (1, 0)) * s3[None, :]         # (hidden, oup)

    if expand_ratio != 1:
        w1 = jax.random.normal(ks[0], (hidden, inp, 1, 1), jnp.float32) * 0.2
        s1, b1 = _fold_bn(*bn(ks[3], hidden))
        w1f = jnp.transpose(w1[:, :, 0, 0], (1, 0)) * s1[None, :]     # (inp, hidden)
        b1_row = b1[None, :]
        bn1 = (s1, b1)
    else:
        w1 = None
        bn1 = None
        w1f = jnp.zeros((inp, hidden), jnp.float32)    # unused placeholder
        b1_row = jnp.zeros((1, hidden), jnp.float32)   # unused placeholder

    kernel_params = (w1f, b1_row, dwf, b2[None, :], w2f, b3[None, :])
    raw = dict(w1=w1, bn1=bn1, dw=dw, bn2=(s2, b2), w2=w2, bn3=(s3, b3))
    return kernel_params, raw


def reference_forward(x_nchw, raw, stride, expand_ratio):
    """Pure-JAX NCHW reference mirroring the PyTorch module (eval-mode BN)."""
    dn = ("NCHW", "OIHW", "NCHW")
    dw, w2 = raw["dw"], raw["w2"]
    s2, b2 = raw["bn2"]
    s3, b3 = raw["bn3"]
    hidden = dw.shape[0]
    inp, oup = x_nchw.shape[1], w2.shape[0]
    use_res = (stride == 1 and inp == oup)

    y = x_nchw
    if expand_ratio != 1:
        w1 = raw["w1"]
        s1, b1 = raw["bn1"]
        y = lax.conv_general_dilated(y, w1, (1, 1), "VALID", dimension_numbers=dn)
        y = y * s1[None, :, None, None] + b1[None, :, None, None]
        y = jnp.clip(y, 0.0, 6.0)

    y = lax.conv_general_dilated(y, dw, (stride, stride), [(1, 1), (1, 1)],
                                 dimension_numbers=dn, feature_group_count=hidden)
    y = y * s2[None, :, None, None] + b2[None, :, None, None]
    y = jnp.clip(y, 0.0, 6.0)

    y = lax.conv_general_dilated(y, w2, (1, 1), "VALID", dimension_numbers=dn)
    y = y * s3[None, :, None, None] + b3[None, :, None, None]

    if use_res:
        y = y + x_nchw
    return y


if __name__ == "__main__":
    key = jax.random.PRNGKey(0)

    cases = [
        # Headline v6e/v7x config: bf16 MXU operands AND bf16 depthwise/scratch;
        # B=4 with batch_tile=1 gives a 4-step pipelined "parallel" grid.
        # Loose tolerance reflects bf16 rounding through all three stages; the
        # all-f32 case below validates the same kernel structure tightly.
        dict(name="expand4_res_bf16", B=4, inp=8, oup=8, H=8, W=8, stride=1,
             expand_ratio=4, mxu_dtype=jnp.bfloat16, compute_dtype=jnp.bfloat16,
             atol=3e-1, rtol=2e-1),
        # Same structure, all-f32 (v5e-style compute path): exact-math check,
        # including the exact f32 residual and the 3-row-window tap reuse.
        dict(name="expand4_res_f32", B=2, inp=8, oup=8, H=8, W=8, stride=1,
             expand_ratio=4, mxu_dtype=jnp.float32, compute_dtype=jnp.float32,
             atol=1e-4, rtol=1e-4),
        # expand_ratio == 1 branch (no expansion conv, no residual), f32 exact.
        dict(name="expand1_f32", B=2, inp=16, oup=24, H=8, W=8, stride=1,
             expand_ratio=1, mxu_dtype=jnp.float32, compute_dtype=jnp.float32,
             atol=1e-4, rtol=1e-4),
    ]

    for idx, cfg in enumerate(cases):
        kx, kp = jax.random.split(jax.random.fold_in(key, idx))
        x = jax.random.normal(kx, (cfg["B"], cfg["inp"], cfg["H"], cfg["W"]),
                              jnp.float32)
        kernel_params, raw = make_params(kp, cfg["inp"], cfg["oup"],
                                         cfg["expand_ratio"])

        out = inverted_residual_pallas(x, kernel_params, cfg["stride"],
                                       cfg["expand_ratio"],
                                       mxu_dtype=cfg["mxu_dtype"],
                                       compute_dtype=cfg["compute_dtype"])
        out = jax.block_until_ready(out)

        ref = reference_forward(x, raw, cfg["stride"], cfg["expand_ratio"])
        ref = jax.block_until_ready(ref)

        assert out.shape == ref.shape, (cfg["name"], out.shape, ref.shape)
        err = float(jnp.max(jnp.abs(out - ref)))
        assert jnp.allclose(out, ref, atol=cfg["atol"], rtol=cfg["rtol"]), \
            (cfg["name"], err)

    print("KERNEL_OK")
</pallas_src>

<mosaic_0001>
module attributes {stable_mosaic.version = 11 : i64} {
  func.func @kernel(%arg0: i32, %arg1: memref<1x8x8x8xf32, #tpu.memory_space<vmem>>, %arg2: memref<8x128xbf16, #tpu.memory_space<vmem>>, %arg3: memref<1x128xf32, #tpu.memory_space<vmem>>, %arg4: memref<9x128xbf16, #tpu.memory_space<vmem>>, %arg5: memref<1x128xf32, #tpu.memory_space<vmem>>, %arg6: memref<128x8xbf16, #tpu.memory_space<vmem>>, %arg7: memref<1x8xf32, #tpu.memory_space<vmem>>, %arg8: memref<1x8x8x8xf32, #tpu.memory_space<vmem>>, %arg9: memref<1x10x10x128xbf16, #tpu.memory_space<vmem>>) attributes {dimension_semantics = [#tpu.dimension_semantics<parallel>], iteration_bounds = array<i64: 4>, scalar_prefetch = 0 : i64, scratch_operands = 1 : i64, tpu.core_type = #tpu.core_type<tc>, window_params = [{transform_indices = @transform_0, window_bounds = array<i64: 1, 8, 8, 8>}, {pipeline_mode = #tpu.pipeline_mode<synchronous>, transform_indices = @transform_1, window_bounds = array<i64: 8, 128>}, {pipeline_mode = #tpu.pipeline_mode<synchronous>, transform_indices = @transform_2, window_bounds = array<i64: 1, 128>}, {pipeline_mode = #tpu.pipeline_mode<synchronous>, transform_indices = @transform_3, window_bounds = array<i64: 9, 128>}, {pipeline_mode = #tpu.pipeline_mode<synchronous>, transform_indices = @transform_4, window_bounds = array<i64: 1, 128>}, {pipeline_mode = #tpu.pipeline_mode<synchronous>, transform_indices = @transform_5, window_bounds = array<i64: 128, 8>}, {pipeline_mode = #tpu.pipeline_mode<synchronous>, transform_indices = @transform_6, window_bounds = array<i64: 1, 8>}, {transform_indices = @transform_7, window_bounds = array<i64: 1, 8, 8, 8>}]} {
    %cst = arith.constant 0.000000e+00 : bf16
    %0 = vector.broadcast %cst : bf16 to vector<1x1x10x128xbf16>
    %c0 = arith.constant 0 : index
    %c0_0 = arith.constant 0 : index
    %c0_1 = arith.constant 0 : index
    %c0_2 = arith.constant 0 : index
    %1 = vector.load %arg9[%c0, %c0_0, %c0_1, %c0_2] : memref<1x10x10x128xbf16, #tpu.memory_space<vmem>>, vector<1x1x10x128xbf16>
    tpu.vector_store %arg9[%c0, %c0_0, %c0_1, %c0_2], %0 {strides = array<i32>} : memref<1x10x10x128xbf16, #tpu.memory_space<vmem>>, vector<1x1x10x128xbf16>,
    %c0_3 = arith.constant 0 : index
    %c9 = arith.constant 9 : index
    %c0_4 = arith.constant 0 : index
    %c0_5 = arith.constant 0 : index
    %2 = vector.load %arg9[%c0_3, %c9, %c0_4, %c0_5] : memref<1x10x10x128xbf16, #tpu.memory_space<vmem>>, vector<1x1x10x128xbf16>
    tpu.vector_store %arg9[%c0_3, %c9, %c0_4, %c0_5], %0 {strides = array<i32>} : memref<1x10x10x128xbf16, #tpu.memory_space<vmem>>, vector<1x1x10x128xbf16>,
    %cst_6 = arith.constant 0.000000e+00 : bf16
    %3 = vector.broadcast %cst_6 : bf16 to vector<1x8x1x128xbf16>
    %c0_7 = arith.constant 0 : index
    %c1 = arith.constant 1 : index
    %c0_8 = arith.constant 0 : index
    %c0_9 = arith.constant 0 : index
    %4 = vector.load %arg9[%c0_7, %c1, %c0_8, %c0_9] : memref<1x10x10x128xbf16, #tpu.memory_space<vmem>>, vector<1x8x1x128xbf16>
    tpu.vector_store %arg9[%c0_7, %c1, %c0_8, %c0_9], %3 {strides = array<i32>} : memref<1x10x10x128xbf16, #tpu.memory_space<vmem>>, vector<1x8x1x128xbf16>,
    %c0_10 = arith.constant 0 : index
    %c1_11 = arith.constant 1 : index
    %c9_12 = arith.constant 9 : index
    %c0_13 = arith.constant 0 : index
    %5 = vector.load %arg9[%c0_10, %c1_11, %c9_12, %c0_13] : memref<1x10x10x128xbf16, #tpu.memory_space<vmem>>, vector<1x8x1x128xbf16>
    tpu.vector_store %arg9[%c0_10, %c1_11, %c9_12, %c0_13], %3 {strides = array<i32>} : memref<1x10x10x128xbf16, #tpu.memory_space<vmem>>, vector<1x8x1x128xbf16>,
    %c0_14 = arith.constant 0 : index
    %c0_15 = arith.constant 0 : index
    %c0_16 = arith.constant 0 : index
    %c0_17 = arith.constant 0 : index
    %6 = vector.load %arg1[%c0_14, %c0_15, %c0_16, %c0_17] : memref<1x8x8x8xf32, #tpu.memory_space<vmem>>, vector<1x8x8x8xf32>
    %7 = vector.shape_cast %6 : vector<1x8x8x8xf32> to vector<64x8xf32>
    %8 = arith.truncf %7 : vector<64x8xf32> to vector<64x8xbf16>
    %c0_18 = arith.constant 0 : index
    %c0_19 = arith.constant 0 : index
    %9 = vector.load %arg2[%c0_18, %c0_19] : memref<8x128xbf16, #tpu.memory_space<vmem>>, vector<8x128xbf16>
    %cst_20 = arith.constant dense<0.000000e+00> : vector<64x128xf32>
    %10 = tpu.matmul %8, %9, %cst_20 {dimension_numbers = #tpu.dot_dimension_numbers<[1], [0], [0], [1], [0, 0, 1, 1], [], []>} : vector<64x8xbf16>, vector<8x128xbf16>, vector<64x128xf32> -> vector<64x128xf32>
    %c0_21 = arith.constant 0 : index
    %c0_22 = arith.constant 0 : index
    %11 = vector.load %arg3[%c0_21, %c0_22] : memref<1x128xf32, #tpu.memory_space<vmem>>, vector<1x128xf32>
    %12 = vector.broadcast %11 : vector<1x128xf32> to vector<64x128xf32>
    %13 = arith.addf %10, %12 : vector<64x128xf32>
    %cst_23 = arith.constant 0.000000e+00 : f32
    %cst_24 = arith.constant 6.000000e+00 : f32
    %14 = vector.broadcast %cst_23 : f32 to vector<64x128xf32>
    %15 = arith.maximumf %14, %13 : vector<64x128xf32>
    %16 = vector.broadcast %cst_24 : f32 to vector<64x128xf32>
    %17 = arith.minimumf %16, %15 : vector<64x128xf32>
    %18 = vector.shape_cast %17 : vector<64x128xf32> to vector<1x8x8x128xf32>
    %19 = arith.truncf %18 : vector<1x8x8x128xf32> to vector<1x8x8x128xbf16>
    %c0_25 = arith.constant 0 : index
    %c1_26 = arith.constant 1 : index
    %c1_27 = arith.constant 1 : index
    %c0_28 = arith.constant 0 : index
    %20 = vector.load %arg9[%c0_25, %c1_26, %c1_27, %c0_28] : memref<1x10x10x128xbf16, #tpu.memory_space<vmem>>, vector<1x8x8x128xbf16>
    tpu.vector_store %arg9[%c0_25, %c1_26, %c1_27, %c0_28], %19 {strides = array<i32>} : memref<1x10x10x128xbf16, #tpu.memory_space<vmem>>, vector<1x8x8x128xbf16>,
    %c0_29 = arith.constant 0 : index
    %c0_30 = arith.constant 0 : index
    %21 = vector.load %arg4[%c0_29, %c0_30] : memref<9x128xbf16, #tpu.memory_space<vmem>>, vector<1x128xbf16>
    %22 = vector.shape_cast %21 : vector<1x128xbf16> to vector<128xbf16>
    %c1_31 = arith.constant 1 : index
    %c0_32 = arith.constant 0 : index
    %23 = vector.load %arg4[%c1_31, %c0_32] : memref<9x128xbf16, #tpu.memory_space<vmem>>, vector<1x128xbf16>
    %24 = vector.shape_cast %23 : vector<1x128xbf16> to vector<128xbf16>
    %c2 = arith.constant 2 : index
    %c0_33 = arith.constant 0 : index
    %25 = vector.load %arg4[%c2, %c0_33] : memref<9x128xbf16, #tpu.memory_space<vmem>>, vector<1x128xbf16>
    %26 = vector.shape_cast %25 : vector<1x128xbf16> to vector<128xbf16>
    %c3 = arith.constant 3 : index
    %c0_34 = arith.constant 0 : index
    %27 = vector.load %arg4[%c3, %c0_34] : memref<9x128xbf16, #tpu.memory_space<vmem>>, vector<1x128xbf16>
    %28 = vector.shape_cast %27 : vector<1x128xbf16> to vector<128xbf16>
    %c4 = arith.constant 4 : index
    %c0_35 = arith.constant 0 : index
    %29 = vector.load %arg4[%c4, %c0_35] : memref<9x128xbf16, #tpu.memory_space<vmem>>, vector<1x128xbf16>
    %30 = vector.shape_cast %29 : vector<1x128xbf16> to vector<128xbf16>
    %c5 = arith.constant 5 : index
    %c0_36 = arith.constant 0 : index
    %31 = vector.load %arg4[%c5, %c0_36] : memref<9x128xbf16, #tpu.memory_space<vmem>>, vector<1x128xbf16>
    %32 = vector.shape_cast %31 : vector<1x128xbf16> to vector<128xbf16>
    %c6 = arith.constant 6 : index
    %c0_37 = arith.constant 0 : index
    %33 = vector.load %arg4[%c6, %c0_37] : memref<9x128xbf16, #tpu.memory_space<vmem>>, vector<1x128xbf16>
    %34 = vector.shape_cast %33 : vector<1x128xbf16> to vector<128xbf16>
    %c7 = arith.constant 7 : index
    %c0_38 = arith.constant 0 : index
    %35 = vector.load %arg4[%c7, %c0_38] : memref<9x128xbf16, #tpu.memory_space<vmem>>, vector<1x128xbf16>
    %36 = vector.shape_cast %35 : vector<1x128xbf16> to vector<128xbf16>
    %c8 = arith.constant 8 : index
    %c0_39 = arith.constant 0 : index
    %37 = vector.load %arg4[%c8, %c0_39] : memref<9x128xbf16, #tpu.memory_space<vmem>>, vector<1x128xbf16>
    %38 = vector.shape_cast %37 : vector<1x128xbf16> to vector<128xbf16>
    %c0_40 = arith.constant 0 : index
    %c0_41 = arith.constant 0 : index
    %c0_42 = arith.constant 0 : index
    %c0_43 = arith.constant 0 : index
    %39 = vector.load %arg9[%c0_40, %c0_41, %c0_42, %c0_43] : memref<1x10x10x128xbf16, #tpu.memory_space<vmem>>, vector<1x8x10x128xbf16>
    %40 = vector.extract_strided_slice %39 {offsets = [0, 0, 0, 0], sizes = [1, 8, 8, 128], strides = [1, 1, 1, 1]} : vector<1x8x10x128xbf16> to vector<1x8x8x128xbf16>
    %41 = vector.extract_strided_slice %39 {offsets = [0, 0, 1, 0], sizes = [1, 8, 8, 128], strides = [1, 1, 1, 1]} : vector<1x8x10x128xbf16> to vector<1x8x8x128xbf16>
    %42 = vector.extract_strided_slice %39 {offsets = [0, 0, 2, 0], sizes = [1, 8, 8, 128], strides = [1, 1, 1, 1]} : vector<1x8x10x128xbf16> to vector<1x8x8x128xbf16>
    %43 = vector.shape_cast %22 : vector<128xbf16> to vector<1x1x1x128xbf16>
    %44 = vector.broadcast %43 : vector<1x1x1x128xbf16> to vector<1x8x8x128xbf16>
    %45 = arith.mulf %40, %44 : vector<1x8x8x128xbf16>
    %46 = vector.shape_cast %24 : vector<128xbf16> to vector<1x1x1x128xbf16>
    %47 = vector.broadcast %46 : vector<1x1x1x128xbf16> to vector<1x8x8x128xbf16>
    %48 = arith.mulf %41, %47 : vector<1x8x8x128xbf16>
    %49 = arith.addf %45, %48 : vector<1x8x8x128xbf16>
    %50 = vector.shape_cast %26 : vector<128xbf16> to vector<1x1x1x128xbf16>
    %51 = vector.broadcast %50 : vector<1x1x1x128xbf16> to vector<1x8x8x128xbf16>
    %52 = arith.mulf %42, %51 : vector<1x8x8x128xbf16>
    %53 = arith.addf %49, %52 : vector<1x8x8x128xbf16>
    %c0_44 = arith.constant 0 : index
    %c1_45 = arith.constant 1 : index
    %c0_46 = arith.constant 0 : index
    %c0_47 = arith.constant 0 : index
    %54 = vector.load %arg9[%c0_44, %c1_45, %c0_46, %c0_47] : memref<1x10x10x128xbf16, #tpu.memory_space<vmem>>, vector<1x8x10x128xbf16>
    %55 = vector.extract_strided_slice %54 {offsets = [0, 0, 0, 0], sizes = [1, 8, 8, 128], strides = [1, 1, 1, 1]} : vector<1x8x10x128xbf16> to vector<1x8x8x128xbf16>
    %56 = vector.extract_strided_slice %54 {offsets = [0, 0, 1, 0], sizes = [1, 8, 8, 128], strides = [1, 1, 1, 1]} : vector<1x8x10x128xbf16> to vector<1x8x8x128xbf16>
    %57 = vector.extract_strided_slice %54 {offsets = [0, 0, 2, 0], sizes = [1, 8, 8, 128], strides = [1, 1, 1, 1]} : vector<1x8x10x128xbf16> to vector<1x8x8x128xbf16>
    %58 = vector.shape_cast %28 : vector<128xbf16> to vector<1x1x1x128xbf16>
    %59 = vector.broadcast %58 : vector<1x1x1x128xbf16> to vector<1x8x8x128xbf16>
    %60 = arith.mulf %55, %59 : vector<1x8x8x128xbf16>
    %61 = arith.addf %53, %60 : vector<1x8x8x128xbf16>
    %62 = vector.shape_cast %30 : vector<128xbf16> to vector<1x1x1x128xbf16>
    %63 = vector.broadcast %62 : vector<1x1x1x128xbf16> to vector<1x8x8x128xbf16>
    %64 = arith.mulf %56, %63 : vector<1x8x8x128xbf16>
    %65 = arith.addf %61, %64 : vector<1x8x8x128xbf16>
    %66 = vector.shape_cast %32 : vector<128xbf16> to vector<1x1x1x128xbf16>
    %67 = vector.broadcast %66 : vector<1x1x1x128xbf16> to vector<1x8x8x128xbf16>
    %68 = arith.mulf %57, %67 : vector<1x8x8x128xbf16>
    %69 = arith.addf %65, %68 : vector<1x8x8x128xbf16>
    %c0_48 = arith.constant 0 : index
    %c2_49 = arith.constant 2 : index
    %c0_50 = arith.constant 0 : index
    %c0_51 = arith.constant 0 : index
    %70 = vector.load %arg9[%c0_48, %c2_49, %c0_50, %c0_51] : memref<1x10x10x128xbf16, #tpu.memory_space<vmem>>, vector<1x8x10x128xbf16>
    %71 = vector.extract_strided_slice %70 {offsets = [0, 0, 0, 0], sizes = [1, 8, 8, 128], strides = [1, 1, 1, 1]} : vector<1x8x10x128xbf16> to vector<1x8x8x128xbf16>
    %72 = vector.extract_strided_slice %70 {offsets = [0, 0, 1, 0], sizes = [1, 8, 8, 128], strides = [1, 1, 1, 1]} : vector<1x8x10x128xbf16> to vector<1x8x8x128xbf16>
    %73 = vector.extract_strided_slice %70 {offsets = [0, 0, 2, 0], sizes = [1, 8, 8, 128], strides = [1, 1, 1, 1]} : vector<1x8x10x128xbf16> to vector<1x8x8x128xbf16>
    %74 = vector.shape_cast %34 : vector<128xbf16> to vector<1x1x1x128xbf16>
    %75 = vector.broadcast %74 : vector<1x1x1x128xbf16> to vector<1x8x8x128xbf16>
    %76 = arith.mulf %71, %75 : vector<1x8x8x128xbf16>
    %77 = arith.addf %69, %76 : vector<1x8x8x128xbf16>
    %78 = vector.shape_cast %36 : vector<128xbf16> to vector<1x1x1x128xbf16>
    %79 = vector.broadcast %78 : vector<1x1x1x128xbf16> to vector<1x8x8x128xbf16>
    %80 = arith.mulf %72, %79 : vector<1x8x8x128xbf16>
    %81 = arith.addf %77, %80 : vector<1x8x8x128xbf16>
    %82 = vector.shape_cast %38 : vector<128xbf16> to vector<1x1x1x128xbf16>
    %83 = vector.broadcast %82 : vector<1x1x1x128xbf16> to vector<1x8x8x128xbf16>
    %84 = arith.mulf %73, %83 : vector<1x8x8x128xbf16>
    %85 = arith.addf %81, %84 : vector<1x8x8x128xbf16>
    %86 = arith.extf %85 : vector<1x8x8x128xbf16> to vector<1x8x8x128xf32>
    %c0_52 = arith.constant 0 : index
    %c0_53 = arith.constant 0 : index
    %87 = vector.load %arg5[%c0_52, %c0_53] : memref<1x128xf32, #tpu.memory_space<vmem>>, vector<1x128xf32>
    %88 = vector.shape_cast %87 : vector<1x128xf32> to vector<128xf32>
    %89 = vector.shape_cast %88 : vector<128xf32> to vector<1x1x1x128xf32>
    %90 = vector.broadcast %89 : vector<1x1x1x128xf32> to vector<1x8x8x128xf32>
    %91 = arith.addf %86, %90 : vector<1x8x8x128xf32>
    %cst_54 = arith.constant 0.000000e+00 : f32
    %cst_55 = arith.constant 6.000000e+00 : f32
    %92 = vector.broadcast %cst_54 : f32 to vector<1x8x8x128xf32>
    %93 = arith.maximumf %92, %91 : vector<1x8x8x128xf32>
    %94 = vector.broadcast %cst_55 : f32 to vector<1x8x8x128xf32>
    %95 = arith.minimumf %94, %93 : vector<1x8x8x128xf32>
    %96 = vector.shape_cast %95 : vector<1x8x8x128xf32> to vector<64x128xf32>
    %97 = arith.truncf %96 : vector<64x128xf32> to vector<64x128xbf16>
    %c0_56 = arith.constant 0 : index
    %c0_57 = arith.constant 0 : index
    %98 = vector.load %arg6[%c0_56, %c0_57] : memref<128x8xbf16, #tpu.memory_space<vmem>>, vector<128x8xbf16>
    %cst_58 = arith.constant dense<0.000000e+00> : vector<64x8xf32>
    %99 = tpu.matmul %97, %98, %cst_58 {dimension_numbers = #tpu.dot_dimension_numbers<[1], [0], [0], [1], [0, 0, 1, 1], [], []>} : vector<64x128xbf16>, vector<128x8xbf16>, vector<64x8xf32> -> vector<64x8xf32>
    %c0_59 = arith.constant 0 : index
    %c0_60 = arith.constant 0 : index
    %100 = vector.load %arg7[%c0_59, %c0_60] : memref<1x8xf32, #tpu.memory_space<vmem>>, vector<1x8xf32>
    %101 = vector.broadcast %100 : vector<1x8xf32> to vector<64x8xf32>
    %102 = arith.addf %99, %101 : vector<64x8xf32>
    %103 = vector.shape_cast %102 : vector<64x8xf32> to vector<1x8x8x8xf32>
    %c0_61 = arith.constant 0 : index
    %c0_62 = arith.constant 0 : index
    %c0_63 = arith.constant 0 : index
    %c0_64 = arith.constant 0 : index
    %104 = vector.load %arg1[%c0_61, %c0_62, %c0_63, %c0_64] : memref<1x8x8x8xf32, #tpu.memory_space<vmem>>, vector<1x8x8x8xf32>
    %105 = arith.addf %103, %104 : vector<1x8x8x8xf32>
    %c0_65 = arith.constant 0 : index
    %c0_66 = arith.constant 0 : index
    %c0_67 = arith.constant 0 : index
    %c0_68 = arith.constant 0 : index
    %106 = vector.load %arg8[%c0_65, %c0_66, %c0_67, %c0_68] : memref<1x8x8x8xf32, #tpu.memory_space<vmem>>, vector<1x8x8x8xf32>
    tpu.vector_store %arg8[%c0_65, %c0_66, %c0_67, %c0_68], %105 {strides = array<i32>} : memref<1x8x8x8xf32, #tpu.memory_space<vmem>>, vector<1x8x8x8xf32>,
    return
  }
  func.func @transform_0(%arg0: i32) -> (i32, i32, i32, i32) {
    %c0_i32 = arith.constant 0 : i32
    %c0_i32_0 = arith.constant 0 : i32
    %c0_i32_1 = arith.constant 0 : i32
    %c0_i32_2 = arith.constant 0 : i32
    return %arg0, %c0_i32, %c0_i32_0, %c0_i32_1 : i32, i32, i32, i32
  }
  func.func @transform_1(%arg0: i32) -> (i32, i32) {
    %c0_i32 = arith.constant 0 : i32
    %c0_i32_0 = arith.constant 0 : i32
    %c0_i32_1 = arith.constant 0 : i32
    return %c0_i32, %c0_i32_0 : i32, i32
  }
  func.func @transform_2(%arg0: i32) -> (i32, i32) {
    %c0_i32 = arith.constant 0 : i32
    %c0_i32_0 = arith.constant 0 : i32
    %c0_i32_1 = arith.constant 0 : i32
    return %c0_i32, %c0_i32_0 : i32, i32
  }
  func.func @transform_3(%arg0: i32) -> (i32, i32) {
    %c0_i32 = arith.constant 0 : i32
    %c0_i32_0 = arith.constant 0 : i32
    %c0_i32_1 = arith.constant 0 : i32
    return %c0_i32, %c0_i32_0 : i32, i32
  }
  func.func @transform_4(%arg0: i32) -> (i32, i32) {
    %c0_i32 = arith.constant 0 : i32
    %c0_i32_0 = arith.constant 0 : i32
    %c0_i32_1 = arith.constant 0 : i32
    return %c0_i32, %c0_i32_0 : i32, i32
  }
  func.func @transform_5(%arg0: i32) -> (i32, i32) {
    %c0_i32 = arith.constant 0 : i32
    %c0_i32_0 = arith.constant 0 : i32
    %c0_i32_1 = arith.constant 0 : i32
    return %c0_i32, %c0_i32_0 : i32, i32
  }
  func.func @transform_6(%arg0: i32) -> (i32, i32) {
    %c0_i32 = arith.constant 0 : i32
    %c0_i32_0 = arith.constant 0 : i32
    %c0_i32_1 = arith.constant 0 : i32
    return %c0_i32, %c0_i32_0 : i32, i32
  }
  func.func @transform_7(%arg0: i32) -> (i32, i32, i32, i32) {
    %c0_i32 = arith.constant 0 : i32
    %c0_i32_0 = arith.constant 0 : i32
    %c0_i32_1 = arith.constant 0 : i32
    %c0_i32_2 = arith.constant 0 : i32
    return %arg0, %c0_i32, %c0_i32_0, %c0_i32_1 : i32, i32, i32, i32
  }
}

</mosaic_0001>

<llo_original>
// kernel: tpu_custom_call.1
$region0: #{tpu_custom_call.1}
  #allocation0 [shape = 'u32[]', space=smem, size = 0x4, offset = 0x4, fixed_abs, tag = 'smem constant byte address 0x4 - core index']
  #allocation1 [shape = 'u32[144,128]{1,0:T(1,128)}', space=vmem, size = 0x12000, scoped, tag = 'internal scratch']
  #allocation2 [shape = 'bf16[1,10,10,128]{3,2,1,0:T(8,128)(2,1)}', space=vmem, size = 0xa000, scoped, tag = 'scratch operand']
  %s0 = inlined_call_operand.hbm [shape: f32[4,8,8,8], index: 0, kind: input, shape index: {}]
  %s1 = inlined_call_operand.vmem [shape: bf16[8,128], index: 1, kind: input, shape index: {}]
  %s2 = inlined_call_operand.vmem [shape: f32[1,128], index: 2, kind: input, shape index: {}]
  %s3 = inlined_call_operand.vmem [shape: bf16[9,128], index: 3, kind: input, shape index: {}]
  %s4 = inlined_call_operand.vmem [shape: f32[1,128], index: 4, kind: input, shape index: {}]
  %s5 = inlined_call_operand.vmem [shape: bf16[128,8], index: 5, kind: input, shape index: {}]
  %s6 = inlined_call_operand.vmem [shape: f32[1,8], index: 6, kind: input, shape index: {}]
  %s7 = inlined_call_operand.hbm [shape: f32[4,8,8,8], index: 7, kind: output, shape index: {}]
  %s8 = sld [smem:[#allocation0]]
  $region65: #{tpu_custom_call.1} parent=0
    _
  %s10 = ssub.s32 1, %s8
  %s11 = scalar_select 0, %s10, %s8
  $region1: #{tpu_custom_call.1} parent=0
    #allocation3 [shape = 'u8[65536]{0}', space=vmem, size = 0x10000, scoped, tag = 'input window, operand 0']
    #allocation4 [shape = 's32[2]{0}', space=sflag, size = 0x8, scoped, tag = 'scoped memory for tpu_custom_call.1']
    #allocation5 [shape = 's32[2]{0}', space=sflag, size = 0x8, scoped, tag = 'scoped memory for tpu_custom_call.1']
    #allocation6 [shape = 'u8[65536]{0}', space=vmem, size = 0x10000, scoped, tag = 'output window, operand 0']
    %12 = vsyncpa [#allocation4], 0
    %s13 = scalar_lea.sflag [#allocation4], 1
    %14 = vsyncpa %s13, 0
    %15 = vsyncpa [#allocation5], 0
    %s16 = scalar_lea.sflag [#allocation5], 1
    %17 = vsyncpa %s16, 0
    loop: start=0, step=1, limit=6
    $region2: #{tpu_custom_call.1} parent=1 // loop_pre_header
      _
    $region3: #{tpu_custom_call.1} parent=1 // loop_header
      %s19 = sphi 0, %s23
      %p20 = scmp.ge.s32.totalorder %s19, 6
      %s29 = sphi 0, %s31
      %s32 = sphi 0, %s29
      %s33 = sphi 0, %s32
      %s49 = sphi 0, %s33
      %s53 = sphi 0, %s53
      %s55 = sphi 0, %s53
      %s56 = sphi 0, %s55
      %s70 = sphi 0, %s56
      %s74 = sphi 0, %s74
      %s76 = sphi 0, %s74
      %s77 = sphi 0, %s76
      %s91 = sphi 0, %s77
      %s95 = sphi 0, %s95
      %s97 = sphi 0, %s95
      %s98 = sphi 0, %s97
      %s112 = sphi 0, %s98
      %s116 = sphi 0, %s116
      %s118 = sphi 0, %s116
      %s119 = sphi 0, %s118
      %s133 = sphi 0, %s119
      %s137 = sphi 0, %s137
      %s139 = sphi 0, %s137
      %s140 = sphi 0, %s139
      %s154 = sphi 0, %s140
      %s158 = sphi 0, %s158
      %s160 = sphi 0, %s158
      %s161 = sphi 0, %s160
      %s175 = sphi 0, %s161
      %s181 = sphi 0, %s183
      %s184 = sphi 0, %s181
      %s185 = sphi 0, %s184
      %s201 = sphi 0, %s185
    $region4: #{tpu_custom_call.1} parent=1 // loop_header_branch
      %22 = sbr.rel (%p20) target = $region8
    $region5: #{tpu_custom_call.1} parent=1 // loop_body
      %s24 = ssub.s32 %s19, 1
      %s25 = ssub.s32 %s19, 2
      %s26 = sadd.s32 %s19, 1
      %s27 = ssub.s32 %s19, %s26
      %p28 = scmp.eq.s32.totalorder %s27, 0
      %s30 = sadd.s32 %s29, 1
      %s31 = scalar_select %p28, %s29, %s30
      %p34 = pneg %p28
      %p35 = scmp.eq.s32.totalorder %s19, 3
      %p36 = por %p34, %p35
      %p37 = scmp.ne.s32.totalorder %s29, %s32
      %p38 = scmp.eq.s32.totalorder %s19, 0
      %p39 = por %p37, %p38
      %p40 = scmp.ne.s32.totalorder %s29, %s32
      %p41 = scmp.eq.s32.totalorder %s24, 3
      %p42 = por %p40, %p41
      %p43 = scmp.ne.s32.totalorder %s32, %s33
      %p44 = scmp.eq.s32.totalorder %s24, 0
      %p45 = por %p43, %p44
      %p46 = scmp.ne.s32.totalorder %s32, %s33
      %p47 = scmp.eq.s32.totalorder %s25, 3
      %p48 = por %p46, %p47
      %p50 = scmp.ne.s32.totalorder %s33, %s49
      %p51 = scmp.eq.s32.totalorder %s25, 0
      %p52 = por %p50, %p51
      %s54 = sadd.s32 %s53, 1
      %p57 = scmp.eq.s32.totalorder %s19, 3
      %p58 = scmp.ne.s32.totalorder %s53, %s55
      %p59 = scmp.eq.s32.totalorder %s19, 0
      %p60 = por %p58, %p59
      %p61 = scmp.ne.s32.totalorder %s53, %s55
      %p62 = scmp.eq.s32.totalorder %s24, 3
      %p63 = por %p61, %p62
      %p64 = scmp.ne.s32.totalorder %s55, %s56
      %p65 = scmp.eq.s32.totalorder %s24, 0
      %p66 = por %p64, %p65
      %p67 = scmp.ne.s32.totalorder %s55, %s56
      %p68 = scmp.eq.s32.totalorder %s25, 3
      %p69 = por %p67, %p68
      %p71 = scmp.ne.s32.totalorder %s56, %s70
      %p72 = scmp.eq.s32.totalorder %s25, 0
      %p73 = por %p71, %p72
      %s75 = sadd.s32 %s74, 1
      %p78 = scmp.eq.s32.totalorder %s19, 3
      %p79 = scmp.ne.s32.totalorder %s74, %s76
      %p80 = scmp.eq.s32.totalorder %s19, 0
      %p81 = por %p79, %p80
      %p82 = scmp.ne.s32.totalorder %s74, %s76
      %p83 = scmp.eq.s32.totalorder %s24, 3
      %p84 = por %p82, %p83
      %p85 = scmp.ne.s32.totalorder %s76, %s77
      %p86 = scmp.eq.s32.totalorder %s24, 0
      %p87 = por %p85, %p86
      %p88 = scmp.ne.s32.totalorder %s76, %s77
      %p89 = scmp.eq.s32.totalorder %s25, 3
      %p90 = por %p88, %p89
      %p92 = scmp.ne.s32.totalorder %s77, %s91
      %p93 = scmp.eq.s32.totalorder %s25, 0
      %p94 = por %p92, %p93
      %s96 = sadd.s32 %s95, 1
      %p99 = scmp.eq.s32.totalorder %s19, 3
      %p100 = scmp.ne.s32.totalorder %s95, %s97
      %p101 = scmp.eq.s32.totalorder %s19, 0
      %p102 = por %p100, %p101
      %p103 = scmp.ne.s32.totalorder %s95, %s97
      %p104 = scmp.eq.s32.totalorder %s24, 3
      %p105 = por %p103, %p104
      %p106 = scmp.ne.s32.totalorder %s97, %s98
      %p107 = scmp.eq.s32.totalorder %s24, 0
      %p108 = por %p106, %p107
      %p109 = scmp.ne.s32.totalorder %s97, %s98
      %p110 = scmp.eq.s32.totalorder %s25, 3
      %p111 = por %p109, %p110
      %p113 = scmp.ne.s32.totalorder %s98, %s112
      %p114 = scmp.eq.s32.totalorder %s25, 0
      %p115 = por %p113, %p114
      %s117 = sadd.s32 %s116, 1
      %p120 = scmp.eq.s32.totalorder %s19, 3
      %p121 = scmp.ne.s32.totalorder %s116, %s118
      %p122 = scmp.eq.s32.totalorder %s19, 0
      %p123 = por %p121, %p122
      %p124 = scmp.ne.s32.totalorder %s116, %s118
      %p125 = scmp.eq.s32.totalorder %s24, 3
      %p126 = por %p124, %p125
      %p127 = scmp.ne.s32.totalorder %s118, %s119
      %p128 = scmp.eq.s32.totalorder %s24, 0
      %p129 = por %p127, %p128
      %p130 = scmp.ne.s32.totalorder %s118, %s119
      %p131 = scmp.eq.s32.totalorder %s25, 3
      %p132 = por %p130, %p131
      %p134 = scmp.ne.s32.totalorder %s119, %s133
      %p135 = scmp.eq.s32.totalorder %s25, 0
      %p136 = por %p134, %p135
      %s138 = sadd.s32 %s137, 1
      %p141 = scmp.eq.s32.totalorder %s19, 3
      %p142 = scmp.ne.s32.totalorder %s137, %s139
      %p143 = scmp.eq.s32.totalorder %s19, 0
      %p144 = por %p142, %p143
      %p145 = scmp.ne.s32.totalorder %s137, %s139
      %p146 = scmp.eq.s32.totalorder %s24, 3
      %p147 = por %p145, %p146
      %p148 = scmp.ne.s32.totalorder %s139, %s140
      %p149 = scmp.eq.s32.totalorder %s24, 0
      %p150 = por %p148, %p149
      %p151 = scmp.ne.s32.totalorder %s139, %s140
      %p152 = scmp.eq.s32.totalorder %s25, 3
      %p153 = por %p151, %p152
      %p155 = scmp.ne.s32.totalorder %s140, %s154
      %p156 = scmp.eq.s32.totalorder %s25, 0
      %p157 = por %p155, %p156
      %s159 = sadd.s32 %s158, 1
      %p162 = scmp.eq.s32.totalorder %s19, 3
      %p163 = scmp.ne.s32.totalorder %s158, %s160
      %p164 = scmp.eq.s32.totalorder %s19, 0
      %p165 = por %p163, %p164
      %p166 = scmp.ne.s32.totalorder %s158, %s160
      %p167 = scmp.eq.s32.totalorder %s24, 3
      %p168 = por %p166, %p167
      %p169 = scmp.ne.s32.totalorder %s160, %s161
      %p170 = scmp.eq.s32.totalorder %s24, 0
      %p171 = por %p169, %p170
      %p172 = scmp.ne.s32.totalorder %s160, %s161
      %p173 = scmp.eq.s32.totalorder %s25, 3
      %p174 = por %p172, %p173
      %p176 = scmp.ne.s32.totalorder %s161, %s175
      %p177 = scmp.eq.s32.totalorder %s25, 0
      %p178 = por %p176, %p177
      %s179 = ssub.s32 %s19, %s26
      %p180 = scmp.eq.s32.totalorder %s179, 0
      %s182 = sadd.s32 %s181, 1
      %s183 = scalar_select %p180, %s181, %s182
      %p186 = pneg %p180
      %p187 = scmp.eq.s32.totalorder %s19, 3
      %p188 = por %p186, %p187
      %p189 = scmp.ne.s32.totalorder %s181, %s184
      %p190 = scmp.eq.s32.totalorder %s19, 0
      %p191 = por %p189, %p190
      %p192 = scmp.ne.s32.totalorder %s181, %s184
      %p193 = scmp.eq.s32.totalorder %s24, 3
      %p194 = por %p192, %p193
      %p195 = scmp.ne.s32.totalorder %s184, %s185
      %p196 = scmp.eq.s32.totalorder %s24, 0
      %p197 = por %p195, %p196
      %p198 = scmp.ne.s32.totalorder %s184, %s185
      %p199 = scmp.eq.s32.totalorder %s25, 3
      %p200 = por %p198, %p199
      %p202 = scmp.ne.s32.totalorder %s185, %s201
      %p203 = scmp.eq.s32.totalorder %s25, 0
      %p204 = por %p202, %p203
      %p205 = scmp.le.s32.totalorder 1, %s19
      %p206 = scmp.lt.s32.totalorder %s19, 5
      %p207 = pnand %p205, %p206
      %p208 = pneg %p207
      // Predicated region
      $region9: #{tpu_custom_call.1} parent=5 // pred_check
        _
      $region10: #{tpu_custom_call.1} parent=5 // pred_check_branch
        %210 = sbr.rel (%p207) target = $region12
      $region11: #{tpu_custom_call.1} parent=5 // pred_region
        %s211 = ssub.s32 %s19, 1
        // Predicated region
        $region13: #{tpu_custom_call.1} parent=11 // pred_check
          %p212 = pneg %p66
        $region14: #{tpu_custom_call.1} parent=11 // pred_check_branch
          %214 = sbr.rel (%p212) target = $region16
        $region15: #{tpu_custom_call.1} parent=11 // pred_region
          _
        $region16: #{tpu_custom_call.1} parent=11 // pred_fallthru
          _
        // Predicated region
        $region17: #{tpu_custom_call.1} parent=11 // pred_check
          %p215 = pneg %p87
        $region18: #{tpu_custom_call.1} parent=11 // pred_check_branch
          %217 = sbr.rel (%p215) target = $region20
        $region19: #{tpu_custom_call.1} parent=11 // pred_region
          _
        $region20: #{tpu_custom_call.1} parent=11 // pred_fallthru
          _
        // Predicated region
        $region21: #{tpu_custom_call.1} parent=11 // pred_check
          %p218 = pneg %p108
        $region22: #{tpu_custom_call.1} parent=11 // pred_check_branch
          %220 = sbr.rel (%p218) target = $region24
        $region23: #{tpu_custom_call.1} parent=11 // pred_region
          _
        $region24: #{tpu_custom_call.1} parent=11 // pred_fallthru
          _
        // Predicated region
        $region25: #{tpu_custom_call.1} parent=11 // pred_check
          %p221 = pneg %p129
        $region26: #{tpu_custom_call.1} parent=11 // pred_check_branch
          %223 = sbr.rel (%p221) target = $region28
        $region27: #{tpu_custom_call.1} parent=11 // pred_region
          _
        $region28: #{tpu_custom_call.1} parent=11 // pred_fallthru
          _
        // Predicated region
        $region29: #{tpu_custom_call.1} parent=11 // pred_check
          %p224 = pneg %p150
        $region30: #{tpu_custom_call.1} parent=11 // pred_check_branch
          %226 = sbr.rel (%p224) target = $region32
        $region31: #{tpu_custom_call.1} parent=11 // pred_region
          _
        $region32: #{tpu_custom_call.1} parent=11 // pred_fallthru
          _
        // Predicated region
        $region33: #{tpu_custom_call.1} parent=11 // pred_check
          %p227 = pneg %p171
        $region34: #{tpu_custom_call.1} parent=11 // pred_check_branch
          %229 = sbr.rel (%p227) target = $region36
        $region35: #{tpu_custom_call.1} parent=11 // pred_region
          _
        $region36: #{tpu_custom_call.1} parent=11 // pred_fallthru
          _
      $region12: #{tpu_custom_call.1} parent=5 // pred_fallthru
        _
      %p230 = scmp.lt.s32.totalorder %s19, 4
      // Predicated region
      $region37: #{tpu_custom_call.1} parent=5 // pred_check
        %p231 = pneg %p230
      $region38: #{tpu_custom_call.1} parent=5 // pred_check_branch
        %233 = sbr.rel (%p231) target = $region40
      $region39: #{tpu_custom_call.1} parent=5 // pred_region
        // Predicated region
        $region41: #{tpu_custom_call.1} parent=39 // pred_check
          %p234 = pneg %p39
        $region42: #{tpu_custom_call.1} parent=39 // pred_check_branch
          %236 = sbr.rel (%p234) target = $region44
        $region43: #{tpu_custom_call.1} parent=39 // pred_region
          %s237 = sand.u32 %s29, 1
          %s238 = scalar_lea.sflag [#allocation4], %s237
          %s239 = sand.u32 %s29, 1
          %s240 = smul.addr %s239, 64
          %s241 = scalar_lea.vmem [#allocation3], %s240
          %s243 = ssub.s32 1024, 1024
          %244 = vsyncadd %s238, %s243
          %s245 = smul.addr %s19, 8
          %s246 = smul.addr %s245, 128
          %s247 = scalar_lea.hbm %s0, %s246
          %s248 = sshll.u32 %s241, 4
          %s249 = int_to_ptr.vmem [resolvable:$true] %s248
          %254 = dma.hbm_to_vmem [thread:$0]  %s247, 1024, %s249, %s238, 128, 128, 8
        $region44: #{tpu_custom_call.1} parent=39 // pred_fallthru
          _
      $region40: #{tpu_custom_call.1} parent=5 // pred_fallthru
        _
      %p255 = scmp.le.s32.totalorder 1, %s19
      %p256 = scmp.lt.s32.totalorder %s19, 5
      %p257 = pnand %p255, %p256
      %p258 = pneg %p257
      // Predicated region
      $region45: #{tpu_custom_call.1} parent=5 // pred_check
        _
      $region46: #{tpu_custom_call.1} parent=5 // pred_check_branch
        %260 = sbr.rel (%p257) target = $region48
      $region47: #{tpu_custom_call.1} parent=5 // pred_region
        %s261 = ssub.s32 %s19, 1
        %s262 = sand.u32 %s32, 1
        %s263 = scalar_lea.sflag [#allocation4], %s262
        %s264 = sand.u32 %s32, 1
        %s265 = smul.addr %s264, 64
        %s266 = scalar_lea.vmem [#allocation3], %s265
        // Predicated region
        $region49: #{tpu_custom_call.1} parent=47 // pred_check
          %p267 = pneg %p45
        $region50: #{tpu_custom_call.1} parent=47 // pred_check_branch
          %269 = sbr.rel (%p267) target = $region52
        $region51: #{tpu_custom_call.1} parent=47 // pred_region
          %270 = dma.done %s263, 1024
        $region52: #{tpu_custom_call.1} parent=47 // pred_fallthru
          _
        %s271 = sand.u32 %s32, 1
        %s272 = scalar_lea.sflag [#allocation4], %s271
        %s273 = sand.u32 %s32, 1
        %s274 = smul.addr %s273, 64
        %s275 = scalar_lea.vmem [#allocation3], %s274
        %p276 = pneg %p45
        %p277 = pneg %p42
        %p278 = pneg %p66
        %p279 = pneg %p63
        %p280 = pneg %p87
        %p281 = pneg %p84
        %p282 = pneg %p108
        %p283 = pneg %p105
        %p284 = pneg %p129
        %p285 = pneg %p126
        %p286 = pneg %p150
        %p287 = pneg %p147
        %p288 = pneg %p171
        %p289 = pneg %p168
        %p290 = pneg %p197
        %p291 = pneg %p194
        %s292 = sand.u32 %s184, 1
        %s293 = scalar_lea.sflag [#allocation5], %s292
        %s294 = sand.u32 %s184, 1
        %s295 = smul.addr %s294, 64
        %s296 = scalar_lea.vmem [#allocation6], %s295
        %298 = vst [vmem:[#allocation2] sm:$0xf] 0
        %299 = vst [vmem:[#allocation2 + $0x4] sm:$0x1] 0
        %s300 = scalar_lea.vmem [#allocation2], 72
        %301 = vst [vmem:[%s300] sm:$0xf] 0
        %302 = vst [vmem:[%s300 + $0x4] sm:$0x1] 0
        %s303 = scalar_lea.vmem [#allocation2], 8
        %vm304 = vcmask 1040384
        %vm305 = vsmask.f32 256
        %vm306 = vmand %vm304, %vm305
        %v307 = vld [vmem:[%s303] sm:$0x1]
        %v308 = vsel %vm306, 0, %v307
        %309 = vst [vmem:[%s303] sm:$0x1] %v308
        %v310 = vld [vmem:[%s303 + $0x8] sm:$0x1]
        %v311 = vsel %vm306, 0, %v310
        %312 = vst [vmem:[%s303 + $0x8] sm:$0x1] %v311
        %v313 = vld [vmem:[%s303 + $0x10] sm:$0x1]
        %v314 = vsel %vm306, 0, %v313
        %315 = vst [vmem:[%s303 + $0x10] sm:$0x1] %v314
        %v316 = vld [vmem:[%s303 + $0x18] sm:$0x1]
        %v317 = vsel %vm306, 0, %v316
        %318 = vst [vmem:[%s303 + $0x18] sm:$0x1] %v317
        %v319 = vld [vmem:[%s303 + $0x20] sm:$0x1]
        %v320 = vsel %vm306, 0, %v319
        %321 = vst [vmem:[%s303 + $0x20] sm:$0x1] %v320
        %v322 = vld [vmem:[%s303 + $0x28] sm:$0x1]
        %v323 = vsel %vm306, 0, %v322
        %324 = vst [vmem:[%s303 + $0x28] sm:$0x1] %v323
        %v325 = vld [vmem:[%s303 + $0x30] sm:$0x1]
        %v326 = vsel %vm306, 0, %v325
        %327 = vst [vmem:[%s303 + $0x30] sm:$0x1] %v326
        %v328 = vld [vmem:[%s303 + $0x38] sm:$0x1]
        %v329 = vsel %vm306, 0, %v328
        %330 = vst [vmem:[%s303 + $0x38] sm:$0x1] %v329
        %vm331 = vsmask.f32 7938
        %vm332 = vmand %vm304, %vm331
        %v333 = vld [vmem:[%s303 + $0x4] sm:$0x1]
        %v334 = vsel %vm332, 0, %v333
        %335 = vst [vmem:[%s303 + $0x4] sm:$0x1] %v334
        %v336 = vld [vmem:[%s303 + $0xc] sm:$0x1]
        %v337 = vsel %vm332, 0, %v336
        %338 = vst [vmem:[%s303 + $0xc] sm:$0x1] %v337
        %v339 = vld [vmem:[%s303 + $0x14] sm:$0x1]
        %v340 = vsel %vm332, 0, %v339
        %341 = vst [vmem:[%s303 + $0x14] sm:$0x1] %v340
        %v342 = vld [vmem:[%s303 + $0x1c] sm:$0x1]
        %v343 = vsel %vm332, 0, %v342
        %344 = vst [vmem:[%s303 + $0x1c] sm:$0x1] %v343
        %v345 = vld [vmem:[%s303 + $0x24] sm:$0x1]
        %v346 = vsel %vm332, 0, %v345
        %347 = vst [vmem:[%s303 + $0x24] sm:$0x1] %v346
        %v348 = vld [vmem:[%s303 + $0x2c] sm:$0x1]
        %v349 = vsel %vm332, 0, %v348
        %350 = vst [vmem:[%s303 + $0x2c] sm:$0x1] %v349
        %v351 = vld [vmem:[%s303 + $0x34] sm:$0x1]
        %v352 = vsel %vm332, 0, %v351
        %353 = vst [vmem:[%s303 + $0x34] sm:$0x1] %v352
        %v354 = vld [vmem:[%s303 + $0x3c] sm:$0x1]
        %v355 = vsel %vm332, 0, %v354
        %356 = vst [vmem:[%s303 + $0x3c] sm:$0x1] %v355
        %v357 = vld [vmem:[%s266] sm:$0xff]
        %v358 = vld [vmem:[%s266 + $0x8] sm:$0xff]
        %v359 = vld [vmem:[%s266 + $0x10] sm:$0xff]
        %v360 = vld [vmem:[%s266 + $0x18] sm:$0xff]
        %v361 = vld [vmem:[%s266 + $0x20] sm:$0xff]
        %v362 = vld [vmem:[%s266 + $0x28] sm:$0xff]
        %v363 = vld [vmem:[%s266 + $0x30] sm:$0xff]
        %v364 = vld [vmem:[%s266 + $0x38] sm:$0xff]
        %v365 = vpack.c.bf16 %v358, %v357
        %v366 = vpack.c.bf16 %v360, %v359
        %v367 = vpack.c.bf16 %v362, %v361
        %v368 = vpack.c.bf16 %v364, %v363
        %v369 = vld [vmem:[%s1] sm:$0xf]
        %v370 = vld [vmem:[%s2] sm:$0x1]
        %v372 = vlaneseq
        %v373 = vshrl.u32 %v372, 7
        %v374 = vsub.s32 0, %v373
        %v375 = vrot.slane %v370, %v374
        %vm377 = vcmask 64512
        %v379 = vsel %vm377, %v365, 0
        %v382 = vsel %vm377, %v366, 0
        %v385 = vsel %vm377, %v367, 0
        %v388 = vsel %vm377, %v368, 0
        %vm390 = vcmask 1043456
        %v392 = vsel %vm390, %v369, 0
        %394 = vmatprep.subr.bf16.mxu0 0
        %395 = vmatpush1.bf16.msra.mxu0 %v392
        %396 = vmatprep.subr.bf16.mxu0 0
        %397 = vmatpush1.bf16.msra.mxu0 0
        %398 = vmatprep.subr.bf16.mxu0 0
        %399 = vmatpush1.bf16.msra.mxu0 0
        %400 = vmatprep.subr.bf16.mxu0 0
        %401 = vmatpush1.bf16.msra.mxu0 0
        %402 = vmatprep.subr.bf16.mxu0 0
        %403 = vmatpush1.bf16.msra.mxu0 0
        %404 = vmatprep.subr.bf16.mxu0 0
        %405 = vmatpush1.bf16.msra.mxu0 0
        %406 = vmatprep.subr.bf16.mxu0 0
        %407 = vmatpush1.bf16.msra.mxu0 0
        %408 = vmatprep.subr.bf16.mxu0 0
        %409 = vmatpush1.bf16.msra.mxu0 0
        %410 = vmatprep.subr.bf16.mxu0 0
        %411 = vmatpush1.bf16.msra.mxu0 0
        %412 = vmatprep.subr.bf16.mxu0 0
        %413 = vmatpush1.bf16.msra.mxu0 0
        %414 = vmatprep.subr.bf16.mxu0 0
        %415 = vmatpush1.bf16.msra.mxu0 0
        %416 = vmatprep.subr.bf16.mxu0 0
        %417 = vmatpush1.bf16.msra.mxu0 0
        %418 = vmatprep.subr.bf16.mxu0 0
        %419 = vmatpush1.bf16.msra.mxu0 0
        %420 = vmatprep.subr.bf16.mxu0 0
        %421 = vmatpush1.bf16.msra.mxu0 0
        %422 = vmatprep.subr.bf16.mxu0 0
        %423 = vmatpush1.bf16.msra.mxu0 0
        %424 = vmatprep.subr.bf16.mxu0 0
        %425 = vmatpush1.bf16.msra.mxu0 0
        %426 = vmatprep.mubr.bf16.mxu0 0
        %427 = vmatmul.mubr.bf16.gmra.mrb[0].mxu0 %v379
        %v428 = vpop.f32.mrb[0].mxu0
        %v429 = vadd.f32 %v375, %v428
        %v430 = vpop.f32.mrb[0].mxu0
        %v431 = vpop.f32.mrb[0].mxu0
        %v432 = vadd.f32 %v375, %v431
        %v433 = vpop.f32.mrb[0].mxu0
        %434 = vmatprep.mubr.bf16.mxu0 0
        %435 = vmatmul.mubr.bf16.gmra.mrb[0].mxu0 %v382
        %v436 = vpop.f32.mrb[0].mxu0
        %v437 = vadd.f32 %v375, %v436
        %v438 = vpop.f32.mrb[0].mxu0
        %v439 = vpop.f32.mrb[0].mxu0
        %v440 = vadd.f32 %v375, %v439
        %v441 = vpop.f32.mrb[0].mxu0
        %442 = vmatprep.mubr.bf16.mxu0 0
        %443 = vmatmul.mubr.bf16.gmra.mrb[0].mxu0 %v385
        %v444 = vpop.f32.mrb[0].mxu0
        %v445 = vadd.f32 %v375, %v444
        %v446 = vpop.f32.mrb[0].mxu0
        %v447 = vpop.f32.mrb[0].mxu0
        %v448 = vadd.f32 %v375, %v447
        %v449 = vpop.f32.mrb[0].mxu0
        %450 = vmatprep.mubr.bf16.mxu0 0
        %451 = vmatmul.mubr.bf16.gmra.mrb[0].mxu0 %v388
        %v452 = vpop.f32.mrb[0].mxu0
        %v453 = vadd.f32 %v375, %v452
        %v454 = vpop.f32.mrb[0].mxu0
        %v455 = vpop.f32.mrb[0].mxu0
        %v456 = vadd.f32 %v375, %v455
        %v457 = vpop.f32.mrb[0].mxu0
        %458 = vdwg.mxu0
        %v459 = vmax.f32 %v429, 0.0
        %v460 = vmax.f32 %v432, 0.0
        %v461 = vmax.f32 %v437, 0.0
        %v462 = vmax.f32 %v440, 0.0
        %v463 = vmax.f32 %v445, 0.0
        %v464 = vmax.f32 %v448, 0.0
        %v465 = vmax.f32 %v453, 0.0
        %v466 = vmax.f32 %v456, 0.0
        %v467 = vmin.f32 %v459, 6.0
        %v468 = vmin.f32 %v460, 6.0
        %v469 = vmin.f32 %v461, 6.0
        %v470 = vmin.f32 %v462, 6.0
        %v471 = vmin.f32 %v463, 6.0
        %v472 = vmin.f32 %v464, 6.0
        %v473 = vmin.f32 %v465, 6.0
        %v474 = vmin.f32 %v466, 6.0
        %v475 = vpack.c.bf16 %v467, %v467
        %v476 = vpack.c.bf16 %v468, %v468
        %v477 = vpack.c.bf16 %v469, %v469
        %v478 = vpack.c.bf16 %v470, %v470
        %v479 = vpack.c.bf16 %v471, %v471
        %v480 = vpack.c.bf16 %v472, %v472
        %v481 = vpack.c.bf16 %v473, %v473
        %v482 = vpack.c.bf16 %v474, %v474
        %v491 = vunpack.c.l.b16 %v475
        %v492 = vunpack.c.l.b16 %v476
        %v493 = vunpack.c.l.b16 %v477
        %v494 = vunpack.c.l.b16 %v478
        %v495 = vunpack.c.l.b16 %v479
        %v496 = vunpack.c.l.b16 %v480
        %v497 = vunpack.c.l.b16 %v481
        %v498 = vunpack.c.l.b16 %v482
        %v499 = vpack.c.b16 %v491, %v491
        %v500 = vpack.c.b16 %v492, %v492
        %v501 = vpack.c.b16 %v493, %v493
        %v502 = vpack.c.b16 %v494, %v494
        %v503 = vpack.c.b16 %v495, %v495
        %v504 = vpack.c.b16 %v496, %v496
        %v505 = vpack.c.b16 %v497, %v497
        %v506 = vpack.c.b16 %v498, %v498
        %v508 = vshrl.u32 %v499, 16
        %v510 = vrot.slane %v508, 7
        %v511 = vshll.u32 %v499, 16
        %v513 = vor.u32 %v510, %v511
        %v514 = vrot.slane %v510, 4
        %v516 = vshrl.u32 %v500, 16
        %v518 = vrot.slane %v516, 7
        %v519 = vshll.u32 %v500, 16
        %v521 = vor.u32 %v518, %v519
        %v522 = vrot.slane %v518, 4
        %v524 = vshrl.u32 %v501, 16
        %v526 = vrot.slane %v524, 7
        %v527 = vshll.u32 %v501, 16
        %v529 = vor.u32 %v526, %v527
        %v530 = vrot.slane %v526, 4
        %v532 = vshrl.u32 %v502, 16
        %v534 = vrot.slane %v532, 7
        %v535 = vshll.u32 %v502, 16
        %v537 = vor.u32 %v534, %v535
        %v538 = vrot.slane %v534, 4
        %v540 = vshrl.u32 %v503, 16
        %v542 = vrot.slane %v540, 7
        %v543 = vshll.u32 %v503, 16
        %v545 = vor.u32 %v542, %v543
        %v546 = vrot.slane %v542, 4
        %v548 = vshrl.u32 %v504, 16
        %v550 = vrot.slane %v548, 7
        %v551 = vshll.u32 %v504, 16
        %v553 = vor.u32 %v550, %v551
        %v554 = vrot.slane %v550, 4
        %v556 = vshrl.u32 %v505, 16
        %v558 = vrot.slane %v556, 7
        %v559 = vshll.u32 %v505, 16
        %v561 = vor.u32 %v558, %v559
        %v562 = vrot.slane %v558, 4
        %v564 = vshrl.u32 %v506, 16
        %v566 = vrot.slane %v564, 7
        %v567 = vshll.u32 %v506, 16
        %v569 = vor.u32 %v566, %v567
        %v570 = vrot.slane %v566, 4
        %vm587 = vcmask 1043456
        %vm588 = vmand %vm587, %vm331
        %v589 = vld [vmem:[%s303] sm:$0xf]
        %v590 = vsel %vm588, %v513, %v589
        %591 = vst [vmem:[%s303] sm:$0xf] %v590
        %v592 = vld [vmem:[%s303 + $0x4] sm:$0x1]
        %v593 = vsel %vm306, %v514, %v592
        %594 = vst [vmem:[%s303 + $0x4] sm:$0x1] %v593
        %v595 = vld [vmem:[%s303 + $0x8] sm:$0xf]
        %v596 = vsel %vm588, %v521, %v595
        %597 = vst [vmem:[%s303 + $0x8] sm:$0xf] %v596
        %v598 = vld [vmem:[%s303 + $0xc] sm:$0x1]
        %v599 = vsel %vm306, %v522, %v598
        %600 = vst [vmem:[%s303 + $0xc] sm:$0x1] %v599
        %v601 = vld [vmem:[%s303 + $0x10] sm:$0xf]
        %v602 = vsel %vm588, %v529, %v601
        %603 = vst [vmem:[%s303 + $0x10] sm:$0xf] %v602
        %v604 = vld [vmem:[%s303 + $0x14] sm:$0x1]
        %v605 = vsel %vm306, %v530, %v604
        %606 = vst [vmem:[%s303 + $0x14] sm:$0x1] %v605
        %v607 = vld [vmem:[%s303 + $0x18] sm:$0xf]
        %v608 = vsel %vm588, %v537, %v607
        %609 = vst [vmem:[%s303 + $0x18] sm:$0xf] %v608
        %v610 = vld [vmem:[%s303 + $0x1c] sm:$0x1]
        %v611 = vsel %vm306, %v538, %v610
        %612 = vst [vmem:[%s303 + $0x1c] sm:$0x1] %v611
        %v613 = vld [vmem:[%s303 + $0x20] sm:$0xf]
        %v614 = vsel %vm588, %v545, %v613
        %615 = vst [vmem:[%s303 + $0x20] sm:$0xf] %v614
        %v616 = vld [vmem:[%s303 + $0x24] sm:$0x1]
        %v617 = vsel %vm306, %v546, %v616
        %618 = vst [vmem:[%s303 + $0x24] sm:$0x1] %v617
        %v619 = vld [vmem:[%s303 + $0x28] sm:$0xf]
        %v620 = vsel %vm588, %v553, %v619
        %621 = vst [vmem:[%s303 + $0x28] sm:$0xf] %v620
        %v622 = vld [vmem:[%s303 + $0x2c] sm:$0x1]
        %v623 = vsel %vm306, %v554, %v622
        %624 = vst [vmem:[%s303 + $0x2c] sm:$0x1] %v623
        %v625 = vld [vmem:[%s303 + $0x30] sm:$0xf]
        %v626 = vsel %vm588, %v561, %v625
        %627 = vst [vmem:[%s303 + $0x30] sm:$0xf] %v626
        %v628 = vld [vmem:[%s303 + $0x34] sm:$0x1]
        %v629 = vsel %vm306, %v562, %v628
        %630 = vst [vmem:[%s303 + $0x34] sm:$0x1] %v629
        %v631 = vld [vmem:[%s303 + $0x38] sm:$0xf]
        %v632 = vsel %vm588, %v569, %v631
        %633 = vst [vmem:[%s303 + $0x38] sm:$0xf] %v632
        %v634 = vld [vmem:[%s303 + $0x3c] sm:$0x1]
        %v635 = vsel %vm306, %v570, %v634
        %636 = vst [vmem:[%s303 + $0x3c] sm:$0x1] %v635
        %v637 = vld [vmem:[%s3] sm:$0x1]
        %v638 = vld [vmem:[%s3] sm:$0x2]
        %v639 = vld [vmem:[%s3] sm:$0x4]
        %v640 = vld [vmem:[%s3] sm:$0x8]
        %v641 = vld [vmem:[%s3 + $0x4] sm:$0x1]
        %v642 = vld [vmem:[#allocation2] sm:$0xf]
        %v643 = vld [vmem:[#allocation2 + $0x4] sm:$0x1]
        %v644 = vld [vmem:[#allocation2 + $0x8] sm:$0xf]
        %v645 = vld [vmem:[#allocation2 + $0xc] sm:$0x1]
        %v646 = vld [vmem:[#allocation2 + $0x10] sm:$0xf]
        %v647 = vld [vmem:[#allocation2 + $0x14] sm:$0x1]
        %v648 = vld [vmem:[#allocation2 + $0x18] sm:$0xf]
        %v649 = vld [vmem:[#allocation2 + $0x1c] sm:$0x1]
        %v650 = vld [vmem:[#allocation2 + $0x20] sm:$0xf]
        %v651 = vld [vmem:[#allocation2 + $0x24] sm:$0x1]
        %v652 = vld [vmem:[#allocation2 + $0x28] sm:$0xf]
        %v653 = vld [vmem:[#allocation2 + $0x2c] sm:$0x1]
        %v654 = vld [vmem:[#allocation2 + $0x30] sm:$0xf]
        %v655 = vld [vmem:[#allocation2 + $0x34] sm:$0x1]
        %v656 = vld [vmem:[#allocation2 + $0x38] sm:$0xf]
        %v657 = vld [vmem:[#allocation2 + $0x3c] sm:$0x1]
        %v659 = vpack.i.b16 %v637, %v637
        %v661 = vlaneseq
        %v662 = vshrl.u32 %v661, 7
        %v663 = vsub.s32 0, %v662
        %v664 = vrot.slane %v659, %v663
        %v665 = vmul.bf16 %v642, %v664
        %v666 = vmul.bf16 %v644, %v664
        %v667 = vmul.bf16 %v646, %v664
        %v668 = vmul.bf16 %v648, %v664
        %v669 = vmul.bf16 %v650, %v664
        %v670 = vmul.bf16 %v652, %v664
        %v671 = vmul.bf16 %v654, %v664
        %v672 = vmul.bf16 %v656, %v664
        %v673 = vshrl.u32 %v637, 16
        %v674 = vpack.i.b16 %v673, %v673
        %v676 = vlaneseq
        %v677 = vshrl.u32 %v676, 7
        %v678 = vsub.s32 0, %v677
        %v679 = vrot.slane %v674, %v678
        %v681 = vunpack.c.l.b16 %v679
        %v682 = vpack.c.b16 %v681, %v681
        %v684 = vmul.bf16 %v642, %v682
        %v685 = vmul.bf16 %v643, %v682
        %v686 = vmul.bf16 %v644, %v682
        %v687 = vmul.bf16 %v645, %v682
        %v688 = vmul.bf16 %v646, %v682
        %v689 = vmul.bf16 %v647, %v682
        %v690 = vmul.bf16 %v648, %v682
        %v691 = vmul.bf16 %v649, %v682
        %v692 = vmul.bf16 %v650, %v682
        %v693 = vmul.bf16 %v651, %v682
        %v694 = vmul.bf16 %v652, %v682
        %v695 = vmul.bf16 %v653, %v682
        %v696 = vmul.bf16 %v654, %v682
        %v697 = vmul.bf16 %v655, %v682
        %v698 = vmul.bf16 %v656, %v682
        %v699 = vmul.bf16 %v657, %v682
        %vm700 = vsmask.f32 3328
        %vm701 = vsmask.f32 7440
        %vm702 = vmor %vm700, %vm701
        %v704 = vshrl.u32 %v684, 16
        %v706 = vrot.slane %v704, 4
        %v707 = vshll.u32 %v684, 16
        %v709 = vrot.slane %v707, 5
        %v710 = vor.u32 %v706, %v709
        %v711 = vrot.slane %v710, 4
        %v713 = vshll.u32 %v685, 16
        %v715 = vrot.slane %v713, 5
        %v716 = vsel %vm702, %v711, %v715
        %v718 = vshrl.u32 %v686, 16
        %v720 = vrot.slane %v718, 4
        %v721 = vshll.u32 %v686, 16
        %v723 = vrot.slane %v721, 5
        %v724 = vor.u32 %v720, %v723
        %v725 = vrot.slane %v724, 4
        %v727 = vshll.u32 %v687, 16
        %v729 = vrot.slane %v727, 5
        %v730 = vsel %vm702, %v725, %v729
        %v732 = vshrl.u32 %v688, 16
        %v734 = vrot.slane %v732, 4
        %v735 = vshll.u32 %v688, 16
        %v737 = vrot.slane %v735, 5
        %v738 = vor.u32 %v734, %v737
        %v739 = vrot.slane %v738, 4
        %v741 = vshll.u32 %v689, 16
        %v743 = vrot.slane %v741, 5
        %v744 = vsel %vm702, %v739, %v743
        %v746 = vshrl.u32 %v690, 16
        %v748 = vrot.slane %v746, 4
        %v749 = vshll.u32 %v690, 16
        %v751 = vrot.slane %v749, 5
        %v752 = vor.u32 %v748, %v751
        %v753 = vrot.slane %v752, 4
        %v755 = vshll.u32 %v691, 16
        %v757 = vrot.slane %v755, 5
        %v758 = vsel %vm702, %v753, %v757
        %v760 = vshrl.u32 %v692, 16
        %v762 = vrot.slane %v760, 4
        %v763 = vshll.u32 %v692, 16
        %v765 = vrot.slane %v763, 5
        %v766 = vor.u32 %v762, %v765
        %v767 = vrot.slane %v766, 4
        %v769 = vshll.u32 %v693, 16
        %v771 = vrot.slane %v769, 5
        %v772 = vsel %vm702, %v767, %v771
        %v774 = vshrl.u32 %v694, 16
        %v776 = vrot.slane %v774, 4
        %v777 = vshll.u32 %v694, 16
        %v779 = vrot.slane %v777, 5
        %v780 = vor.u32 %v776, %v779
        %v781 = vrot.slane %v780, 4
        %v783 = vshll.u32 %v695, 16
        %v785 = vrot.slane %v783, 5
        %v786 = vsel %vm702, %v781, %v785
        %v788 = vshrl.u32 %v696, 16
        %v790 = vrot.slane %v788, 4
        %v791 = vshll.u32 %v696, 16
        %v793 = vrot.slane %v791, 5
        %v794 = vor.u32 %v790, %v793
        %v795 = vrot.slane %v794, 4
        %v797 = vshll.u32 %v697, 16
        %v799 = vrot.slane %v797, 5
        %v800 = vsel %vm702, %v795, %v799
        %v802 = vshrl.u32 %v698, 16
        %v804 = vrot.slane %v802, 4
        %v805 = vshll.u32 %v698, 16
        %v807 = vrot.slane %v805, 5
        %v808 = vor.u32 %v804, %v807
        %v809 = vrot.slane %v808, 4
        %v811 = vshll.u32 %v699, 16
        %v813 = vrot.slane %v811, 5
        %v814 = vsel %vm702, %v809, %v813
        %v823 = vadd.bf16 %v665, %v716
        %v824 = vadd.bf16 %v666, %v730
        %v825 = vadd.bf16 %v667, %v744
        %v826 = vadd.bf16 %v668, %v758
        %v827 = vadd.bf16 %v669, %v772
        %v828 = vadd.bf16 %v670, %v786
        %v829 = vadd.bf16 %v671, %v800
        %v830 = vadd.bf16 %v672, %v814
        %v832 = vpack.i.b16 %v638, %v638
        %v834 = vlaneseq
        %v835 = vshrl.u32 %v834, 7
        %v836 = vsub.s32 1, %v835
        %v837 = vrot.slane %v832, %v836
        %v839 = vunpack.c.l.b16 %v837
        %v840 = vpack.c.b16 %v839, %v839
        %v842 = vmul.bf16 %v642, %v840
        %v843 = vmul.bf16 %v643, %v840
        %v844 = vmul.bf16 %v644, %v840
        %v845 = vmul.bf16 %v645, %v840
        %v846 = vmul.bf16 %v646, %v840
        %v847 = vmul.bf16 %v647, %v840
        %v848 = vmul.bf16 %v648, %v840
        %v849 = vmul.bf16 %v649, %v840
        %v850 = vmul.bf16 %v650, %v840
        %v851 = vmul.bf16 %v651, %v840
        %v852 = vmul.bf16 %v652, %v840
        %v853 = vmul.bf16 %v653, %v840
        %v854 = vmul.bf16 %v654, %v840
        %v855 = vmul.bf16 %v655, %v840
        %v856 = vmul.bf16 %v656, %v840
        %v857 = vmul.bf16 %v657, %v840
        %vm874 = vcmask 1042432
        %vm875 = vcmask 1046532
        %vm876 = vmor %vm874, %vm875
        %v877 = vrot.slane %v842, 5
        %v878 = vrot.slane %v877, 4
        %v879 = vrot.slane %v843, 5
        %v880 = vsel %vm876, %v878, %v879
        %v881 = vrot.slane %v844, 5
        %v882 = vrot.slane %v881, 4
        %v883 = vrot.slane %v845, 5
        %v884 = vsel %vm876, %v882, %v883
        %v885 = vrot.slane %v846, 5
        %v886 = vrot.slane %v885, 4
        %v887 = vrot.slane %v847, 5
        %v888 = vsel %vm876, %v886, %v887
        %v889 = vrot.slane %v848, 5
        %v890 = vrot.slane %v889, 4
        %v891 = vrot.slane %v849, 5
        %v892 = vsel %vm876, %v890, %v891
        %v893 = vrot.slane %v850, 5
        %v894 = vrot.slane %v893, 4
        %v895 = vrot.slane %v851, 5
        %v896 = vsel %vm876, %v894, %v895
        %v897 = vrot.slane %v852, 5
        %v898 = vrot.slane %v897, 4
        %v899 = vrot.slane %v853, 5
        %v900 = vsel %vm876, %v898, %v899
        %v901 = vrot.slane %v854, 5
        %v902 = vrot.slane %v901, 4
        %v903 = vrot.slane %v855, 5
        %v904 = vsel %vm876, %v902, %v903
        %v905 = vrot.slane %v856, 5
        %v906 = vrot.slane %v905, 4
        %v907 = vrot.slane %v857, 5
        %v908 = vsel %vm876, %v906, %v907
        %v917 = vadd.bf16 %v823, %v880
        %v918 = vadd.bf16 %v824, %v884
        %v919 = vadd.bf16 %v825, %v888
        %v920 = vadd.bf16 %v826, %v892
        %v921 = vadd.bf16 %v827, %v896
        %v922 = vadd.bf16 %v828, %v900
        %v923 = vadd.bf16 %v829, %v904
        %v924 = vadd.bf16 %v830, %v908
        %v925 = vld [vmem:[%s303] sm:$0xf]
        %v926 = vld [vmem:[%s303 + $0x4] sm:$0x1]
        %v927 = vld [vmem:[%s303 + $0x8] sm:$0xf]
        %v928 = vld [vmem:[%s303 + $0xc] sm:$0x1]
        %v929 = vld [vmem:[%s303 + $0x10] sm:$0xf]
        %v930 = vld [vmem:[%s303 + $0x14] sm:$0x1]
        %v931 = vld [vmem:[%s303 + $0x18] sm:$0xf]
        %v932 = vld [vmem:[%s303 + $0x1c] sm:$0x1]
        %v933 = vld [vmem:[%s303 + $0x20] sm:$0xf]
        %v934 = vld [vmem:[%s303 + $0x24] sm:$0x1]
        %v935 = vld [vmem:[%s303 + $0x28] sm:$0xf]
        %v936 = vld [vmem:[%s303 + $0x2c] sm:$0x1]
        %v937 = vld [vmem:[%s303 + $0x30] sm:$0xf]
        %v938 = vld [vmem:[%s303 + $0x34] sm:$0x1]
        %v939 = vld [vmem:[%s303 + $0x38] sm:$0xf]
        %v940 = vld [vmem:[%s303 + $0x3c] sm:$0x1]
        %v941 = vshrl.u32 %v638, 16
        %v942 = vpack.i.b16 %v941, %v941
        %v944 = vlaneseq
        %v945 = vshrl.u32 %v944, 7
        %v946 = vsub.s32 1, %v945
        %v947 = vrot.slane %v942, %v946
        %v948 = vmul.bf16 %v925, %v947
        %v949 = vmul.bf16 %v927, %v947
        %v950 = vmul.bf16 %v929, %v947
        %v951 = vmul.bf16 %v931, %v947
        %v952 = vmul.bf16 %v933, %v947
        %v953 = vmul.bf16 %v935, %v947
        %v954 = vmul.bf16 %v937, %v947
        %v955 = vmul.bf16 %v939, %v947
        %v956 = vadd.bf16 %v917, %v948
        %v957 = vadd.bf16 %v918, %v949
        %v958 = vadd.bf16 %v919, %v950
        %v959 = vadd.bf16 %v920, %v951
        %v960 = vadd.bf16 %v921, %v952
        %v961 = vadd.bf16 %v922, %v953
        %v962 = vadd.bf16 %v923, %v954
        %v963 = vadd.bf16 %v924, %v955
        %v965 = vpack.i.b16 %v639, %v639
        %v967 = vlaneseq
        %v968 = vshrl.u32 %v967, 7
        %v969 = vsub.s32 2, %v968
        %v970 = vrot.slane %v965, %v969
        %v972 = vunpack.c.l.b16 %v970
        %v973 = vpack.c.b16 %v972, %v972
        %v975 = vmul.bf16 %v925, %v973
        %v976 = vmul.bf16 %v926, %v973
        %v977 = vmul.bf16 %v927, %v973
        %v978 = vmul.bf16 %v928, %v973
        %v979 = vmul.bf16 %v929, %v973
        %v980 = vmul.bf16 %v930, %v973
        %v981 = vmul.bf16 %v931, %v973
        %v982 = vmul.bf16 %v932, %v973
        %v983 = vmul.bf16 %v933, %v973
        %v984 = vmul.bf16 %v934, %v973
        %v985 = vmul.bf16 %v935, %v973
        %v986 = vmul.bf16 %v936, %v973
        %v987 = vmul.bf16 %v937, %v973
        %v988 = vmul.bf16 %v938, %v973
        %v989 = vmul.bf16 %v939, %v973
        %v990 = vmul.bf16 %v940, %v973
        %v992 = vshrl.u32 %v975, 16
        %v994 = vrot.slane %v992, 4
        %v995 = vshll.u32 %v975, 16
        %v997 = vrot.slane %v995, 5
        %v998 = vor.u32 %v994, %v997
        %v999 = vrot.slane %v998, 4
        %v1001 = vshll.u32 %v976, 16
        %v1003 = vrot.slane %v1001, 5
        %v1004 = vsel %vm702, %v999, %v1003
        %v1006 = vshrl.u32 %v977, 16
        %v1008 = vrot.slane %v1006, 4
        %v1009 = vshll.u32 %v977, 16
        %v1011 = vrot.slane %v1009, 5
        %v1012 = vor.u32 %v1008, %v1011
        %v1013 = vrot.slane %v1012, 4
        %v1015 = vshll.u32 %v978, 16
        %v1017 = vrot.slane %v1015, 5
        %v1018 = vsel %vm702, %v1013, %v1017
        %v1020 = vshrl.u32 %v979, 16
        %v1022 = vrot.slane %v1020, 4
        %v1023 = vshll.u32 %v979, 16
        %v1025 = vrot.slane %v1023, 5
        %v1026 = vor.u32 %v1022, %v1025
        %v1027 = vrot.slane %v1026, 4
        %v1029 = vshll.u32 %v980, 16
        %v1031 = vrot.slane %v1029, 5
        %v1032 = vsel %vm702, %v1027, %v1031
        %v1034 = vshrl.u32 %v981, 16
        %v1036 = vrot.slane %v1034, 4
        %v1037 = vshll.u32 %v981, 16
        %v1039 = vrot.slane %v1037, 5
        %v1040 = vor.u32 %v1036, %v1039
        %v1041 = vrot.slane %v1040, 4
        %v1043 = vshll.u32 %v982, 16
        %v1045 = vrot.slane %v1043, 5
        %v1046 = vsel %vm702, %v1041, %v1045
        %v1048 = vshrl.u32 %v983, 16
        %v1050 = vrot.slane %v1048, 4
        %v1051 = vshll.u32 %v983, 16
        %v1053 = vrot.slane %v1051, 5
        %v1054 = vor.u32 %v1050, %v1053
        %v1055 = vrot.slane %v1054, 4
        %v1057 = vshll.u32 %v984, 16
        %v1059 = vrot.slane %v1057, 5
        %v1060 = vsel %vm702, %v1055, %v1059
        %v1062 = vshrl.u32 %v985, 16
        %v1064 = vrot.slane %v1062, 4
        %v1065 = vshll.u32 %v985, 16
        %v1067 = vrot.slane %v1065, 5
        %v1068 = vor.u32 %v1064, %v1067
        %v1069 = vrot.slane %v1068, 4
        %v1071 = vshll.u32 %v986, 16
        %v1073 = vrot.slane %v1071, 5
        %v1074 = vsel %vm702, %v1069, %v1073
        %v1076 = vshrl.u32 %v987, 16
        %v1078 = vrot.slane %v1076, 4
        %v1079 = vshll.u32 %v987, 16
        %v1081 = vrot.slane %v1079, 5
        %v1082 = vor.u32 %v1078, %v1081
        %v1083 = vrot.slane %v1082, 4
        %v1085 = vshll.u32 %v988, 16
        %v1087 = vrot.slane %v1085, 5
        %v1088 = vsel %vm702, %v1083, %v1087
        %v1090 = vshrl.u32 %v989, 16
        %v1092 = vrot.slane %v1090, 4
        %v1093 = vshll.u32 %v989, 16
        %v1095 = vrot.slane %v1093, 5
        %v1096 = vor.u32 %v1092, %v1095
        %v1097 = vrot.slane %v1096, 4
        %v1099 = vshll.u32 %v990, 16
        %v1101 = vrot.slane %v1099, 5
        %v1102 = vsel %vm702, %v1097, %v1101
        %v1111 = vadd.bf16 %v956, %v1004
        %v1112 = vadd.bf16 %v957, %v1018
        %v1113 = vadd.bf16 %v958, %v1032
        %v1114 = vadd.bf16 %v959, %v1046
        %v1115 = vadd.bf16 %v960, %v1060
        %v1116 = vadd.bf16 %v961, %v1074
        %v1117 = vadd.bf16 %v962, %v1088
        %v1118 = vadd.bf16 %v963, %v1102
        %v1119 = vshrl.u32 %v639, 16
        %v1120 = vpack.i.b16 %v1119, %v1119
        %v1122 = vlaneseq
        %v1123 = vshrl.u32 %v1122, 7
        %v1124 = vsub.s32 2, %v1123
        %v1125 = vrot.slane %v1120, %v1124
        %v1127 = vunpack.c.l.b16 %v1125
        %v1128 = vpack.c.b16 %v1127, %v1127
        %v1130 = vmul.bf16 %v925, %v1128
        %v1131 = vmul.bf16 %v926, %v1128
        %v1132 = vmul.bf16 %v927, %v1128
        %v1133 = vmul.bf16 %v928, %v1128
        %v1134 = vmul.bf16 %v929, %v1128
        %v1135 = vmul.bf16 %v930, %v1128
        %v1136 = vmul.bf16 %v931, %v1128
        %v1137 = vmul.bf16 %v932, %v1128
        %v1138 = vmul.bf16 %v933, %v1128
        %v1139 = vmul.bf16 %v934, %v1128
        %v1140 = vmul.bf16 %v935, %v1128
        %v1141 = vmul.bf16 %v936, %v1128
        %v1142 = vmul.bf16 %v937, %v1128
        %v1143 = vmul.bf16 %v938, %v1128
        %v1144 = vmul.bf16 %v939, %v1128
        %v1145 = vmul.bf16 %v940, %v1128
        %v1162 = vrot.slane %v1130, 5
        %v1163 = vrot.slane %v1162, 4
        %v1164 = vrot.slane %v1131, 5
        %v1165 = vsel %vm876, %v1163, %v1164
        %v1166 = vrot.slane %v1132, 5
        %v1167 = vrot.slane %v1166, 4
        %v1168 = vrot.slane %v1133, 5
        %v1169 = vsel %vm876, %v1167, %v1168
        %v1170 = vrot.slane %v1134, 5
        %v1171 = vrot.slane %v1170, 4
        %v1172 = vrot.slane %v1135, 5
        %v1173 = vsel %vm876, %v1171, %v1172
        %v1174 = vrot.slane %v1136, 5
        %v1175 = vrot.slane %v1174, 4
        %v1176 = vrot.slane %v1137, 5
        %v1177 = vsel %vm876, %v1175, %v1176
        %v1178 = vrot.slane %v1138, 5
        %v1179 = vrot.slane %v1178, 4
        %v1180 = vrot.slane %v1139, 5
        %v1181 = vsel %vm876, %v1179, %v1180
        %v1182 = vrot.slane %v1140, 5
        %v1183 = vrot.slane %v1182, 4
        %v1184 = vrot.slane %v1141, 5
        %v1185 = vsel %vm876, %v1183, %v1184
        %v1186 = vrot.slane %v1142, 5
        %v1187 = vrot.slane %v1186, 4
        %v1188 = vrot.slane %v1143, 5
        %v1189 = vsel %vm876, %v1187, %v1188
        %v1190 = vrot.slane %v1144, 5
        %v1191 = vrot.slane %v1190, 4
        %v1192 = vrot.slane %v1145, 5
        %v1193 = vsel %vm876, %v1191, %v1192
        %v1202 = vadd.bf16 %v1111, %v1165
        %v1203 = vadd.bf16 %v1112, %v1169
        %v1204 = vadd.bf16 %v1113, %v1173
        %v1205 = vadd.bf16 %v1114, %v1177
        %v1206 = vadd.bf16 %v1115, %v1181
        %v1207 = vadd.bf16 %v1116, %v1185
        %v1208 = vadd.bf16 %v1117, %v1189
        %v1209 = vadd.bf16 %v1118, %v1193
        %s1210 = scalar_lea.vmem [#allocation2], 16
        %v1211 = vld [vmem:[%s1210] sm:$0xf]
        %v1212 = vld [vmem:[%s1210 + $0x4] sm:$0x1]
        %v1213 = vld [vmem:[%s1210 + $0x8] sm:$0xf]
        %v1214 = vld [vmem:[%s1210 + $0xc] sm:$0x1]
        %v1215 = vld [vmem:[%s1210 + $0x10] sm:$0xf]
        %v1216 = vld [vmem:[%s1210 + $0x14] sm:$0x1]
        %v1217 = vld [vmem:[%s1210 + $0x18] sm:$0xf]
        %v1218 = vld [vmem:[%s1210 + $0x1c] sm:$0x1]
        %v1219 = vld [vmem:[%s1210 + $0x20] sm:$0xf]
        %v1220 = vld [vmem:[%s1210 + $0x24] sm:$0x1]
        %v1221 = vld [vmem:[%s1210 + $0x28] sm:$0xf]
        %v1222 = vld [vmem:[%s1210 + $0x2c] sm:$0x1]
        %v1223 = vld [vmem:[%s1210 + $0x30] sm:$0xf]
        %v1224 = vld [vmem:[%s1210 + $0x34] sm:$0x1]
        %v1225 = vld [vmem:[%s1210 + $0x38] sm:$0xf]
        %v1226 = vld [vmem:[%s1210 + $0x3c] sm:$0x1]
        %v1228 = vpack.i.b16 %v640, %v640
        %v1230 = vlaneseq
        %v1231 = vshrl.u32 %v1230, 7
        %v1232 = vsub.s32 3, %v1231
        %v1233 = vrot.slane %v1228, %v1232
        %v1234 = vmul.bf16 %v1211, %v1233
        %v1235 = vmul.bf16 %v1213, %v1233
        %v1236 = vmul.bf16 %v1215, %v1233
        %v1237 = vmul.bf16 %v1217, %v1233
        %v1238 = vmul.bf16 %v1219, %v1233
        %v1239 = vmul.bf16 %v1221, %v1233
        %v1240 = vmul.bf16 %v1223, %v1233
        %v1241 = vmul.bf16 %v1225, %v1233
        %v1242 = vadd.bf16 %v1202, %v1234
        %v1243 = vadd.bf16 %v1203, %v1235
        %v1244 = vadd.bf16 %v1204, %v1236
        %v1245 = vadd.bf16 %v1205, %v1237
        %v1246 = vadd.bf16 %v1206, %v1238
        %v1247 = vadd.bf16 %v1207, %v1239
        %v1248 = vadd.bf16 %v1208, %v1240
        %v1249 = vadd.bf16 %v1209, %v1241
        %v1250 = vshrl.u32 %v640, 16
        %v1251 = vpack.i.b16 %v1250, %v1250
        %v1253 = vlaneseq
        %v1254 = vshrl.u32 %v1253, 7
        %v1255 = vsub.s32 3, %v1254
        %v1256 = vrot.slane %v1251, %v1255
        %v1258 = vunpack.c.l.b16 %v1256
        %v1259 = vpack.c.b16 %v1258, %v1258
        %v1261 = vmul.bf16 %v1211, %v1259
        %v1262 = vmul.bf16 %v1212, %v1259
        %v1263 = vmul.bf16 %v1213, %v1259
        %v1264 = vmul.bf16 %v1214, %v1259
        %v1265 = vmul.bf16 %v1215, %v1259
        %v1266 = vmul.bf16 %v1216, %v1259
        %v1267 = vmul.bf16 %v1217, %v1259
        %v1268 = vmul.bf16 %v1218, %v1259
        %v1269 = vmul.bf16 %v1219, %v1259
        %v1270 = vmul.bf16 %v1220, %v1259
        %v1271 = vmul.bf16 %v1221, %v1259
        %v1272 = vmul.bf16 %v1222, %v1259
        %v1273 = vmul.bf16 %v1223, %v1259
        %v1274 = vmul.bf16 %v1224, %v1259
        %v1275 = vmul.bf16 %v1225, %v1259
        %v1276 = vmul.bf16 %v1226, %v1259
        %v1278 = vshrl.u32 %v1261, 16
        %v1280 = vrot.slane %v1278, 4
        %v1281 = vshll.u32 %v1261, 16
        %v1283 = vrot.slane %v1281, 5
        %v1284 = vor.u32 %v1280, %v1283
        %v1285 = vrot.slane %v1284, 4
        %v1287 = vshll.u32 %v1262, 16
        %v1289 = vrot.slane %v1287, 5
        %v1290 = vsel %vm702, %v1285, %v1289
        %v1292 = vshrl.u32 %v1263, 16
        %v1294 = vrot.slane %v1292, 4
        %v1295 = vshll.u32 %v1263, 16
        %v1297 = vrot.slane %v1295, 5
        %v1298 = vor.u32 %v1294, %v1297
        %v1299 = vrot.slane %v1298, 4
        %v1301 = vshll.u32 %v1264, 16
        %v1303 = vrot.slane %v1301, 5
        %v1304 = vsel %vm702, %v1299, %v1303
        %v1306 = vshrl.u32 %v1265, 16
        %v1308 = vrot.slane %v1306, 4
        %v1309 = vshll.u32 %v1265, 16
        %v1311 = vrot.slane %v1309, 5
        %v1312 = vor.u32 %v1308, %v1311
        %v1313 = vrot.slane %v1312, 4
        %v1315 = vshll.u32 %v1266, 16
        %v1317 = vrot.slane %v1315, 5
        %v1318 = vsel %vm702, %v1313, %v1317
        %v1320 = vshrl.u32 %v1267, 16
        %v1322 = vrot.slane %v1320, 4
        %v1323 = vshll.u32 %v1267, 16
        %v1325 = vrot.slane %v1323, 5
        %v1326 = vor.u32 %v1322, %v1325
        %v1327 = vrot.slane %v1326, 4
        %v1329 = vshll.u32 %v1268, 16
        %v1331 = vrot.slane %v1329, 5
        %v1332 = vsel %vm702, %v1327, %v1331
        %v1334 = vshrl.u32 %v1269, 16
        %v1336 = vrot.slane %v1334, 4
        %v1337 = vshll.u32 %v1269, 16
        %v1339 = vrot.slane %v1337, 5
        %v1340 = vor.u32 %v1336, %v1339
        %v1341 = vrot.slane %v1340, 4
        %v1343 = vshll.u32 %v1270, 16
        %v1345 = vrot.slane %v1343, 5
        %v1346 = vsel %vm702, %v1341, %v1345
        %v1348 = vshrl.u32 %v1271, 16
        %v1350 = vrot.slane %v1348, 4
        %v1351 = vshll.u32 %v1271, 16
        %v1353 = vrot.slane %v1351, 5
        %v1354 = vor.u32 %v1350, %v1353
        %v1355 = vrot.slane %v1354, 4
        %v1357 = vshll.u32 %v1272, 16
        %v1359 = vrot.slane %v1357, 5
        %v1360 = vsel %vm702, %v1355, %v1359
        %v1362 = vshrl.u32 %v1273, 16
        %v1364 = vrot.slane %v1362, 4
        %v1365 = vshll.u32 %v1273, 16
        %v1367 = vrot.slane %v1365, 5
        %v1368 = vor.u32 %v1364, %v1367
        %v1369 = vrot.slane %v1368, 4
        %v1371 = vshll.u32 %v1274, 16
        %v1373 = vrot.slane %v1371, 5
        %v1374 = vsel %vm702, %v1369, %v1373
        %v1376 = vshrl.u32 %v1275, 16
        %v1378 = vrot.slane %v1376, 4
        %v1379 = vshll.u32 %v1275, 16
        %v1381 = vrot.slane %v1379, 5
        %v1382 = vor.u32 %v1378, %v1381
        %v1383 = vrot.slane %v1382, 4
        %v1385 = vshll.u32 %v1276, 16
        %v1387 = vrot.slane %v1385, 5
        %v1388 = vsel %vm702, %v1383, %v1387
        %v1397 = vadd.bf16 %v1242, %v1290
        %v1398 = vadd.bf16 %v1243, %v1304
        %v1399 = vadd.bf16 %v1244, %v1318
        %v1400 = vadd.bf16 %v1245, %v1332
        %v1401 = vadd.bf16 %v1246, %v1346
        %v1402 = vadd.bf16 %v1247, %v1360
        %v1403 = vadd.bf16 %v1248, %v1374
        %v1404 = vadd.bf16 %v1249, %v1388
        %v1406 = vpack.i.b16 %v641, %v641
        %v1408 = vlaneseq
        %v1409 = vshrl.u32 %v1408, 7
        %v1410 = vsub.s32 0, %v1409
        %v1411 = vrot.slane %v1406, %v1410
        %v1413 = vunpack.c.l.b16 %v1411
        %v1414 = vpack.c.b16 %v1413, %v1413
        %v1416 = vmul.bf16 %v1211, %v1414
        %v1417 = vmul.bf16 %v1212, %v1414
        %v1418 = vmul.bf16 %v1213, %v1414
        %v1419 = vmul.bf16 %v1214, %v1414
        %v1420 = vmul.bf16 %v1215, %v1414
        %v1421 = vmul.bf16 %v1216, %v1414
        %v1422 = vmul.bf16 %v1217, %v1414
        %v1423 = vmul.bf16 %v1218, %v1414
        %v1424 = vmul.bf16 %v1219, %v1414
        %v1425 = vmul.bf16 %v1220, %v1414
        %v1426 = vmul.bf16 %v1221, %v1414
        %v1427 = vmul.bf16 %v1222, %v1414
        %v1428 = vmul.bf16 %v1223, %v1414
        %v1429 = vmul.bf16 %v1224, %v1414
        %v1430 = vmul.bf16 %v1225, %v1414
        %v1431 = vmul.bf16 %v1226, %v1414
        %v1448 = vrot.slane %v1416, 5
        %v1449 = vrot.slane %v1448, 4
        %v1450 = vrot.slane %v1417, 5
        %v1451 = vsel %vm876, %v1449, %v1450
        %v1452 = vrot.slane %v1418, 5
        %v1453 = vrot.slane %v1452, 4
        %v1454 = vrot.slane %v1419, 5
        %v1455 = vsel %vm876, %v1453, %v1454
        %v1456 = vrot.slane %v1420, 5
        %v1457 = vrot.slane %v1456, 4
        %v1458 = vrot.slane %v1421, 5
        %v1459 = vsel %vm876, %v1457, %v1458
        %v1460 = vrot.slane %v1422, 5
        %v1461 = vrot.slane %v1460, 4
        %v1462 = vrot.slane %v1423, 5
        %v1463 = vsel %vm876, %v1461, %v1462
        %v1464 = vrot.slane %v1424, 5
        %v1465 = vrot.slane %v1464, 4
        %v1466 = vrot.slane %v1425, 5
        %v1467 = vsel %vm876, %v1465, %v1466
        %v1468 = vrot.slane %v1426, 5
        %v1469 = vrot.slane %v1468, 4
        %v1470 = vrot.slane %v1427, 5
        %v1471 = vsel %vm876, %v1469, %v1470
        %v1472 = vrot.slane %v1428, 5
        %v1473 = vrot.slane %v1472, 4
        %v1474 = vrot.slane %v1429, 5
        %v1475 = vsel %vm876, %v1473, %v1474
        %v1476 = vrot.slane %v1430, 5
        %v1477 = vrot.slane %v1476, 4
        %v1478 = vrot.slane %v1431, 5
        %v1479 = vsel %vm876, %v1477, %v1478
        %v1488 = vadd.bf16 %v1397, %v1451
        %v1489 = vadd.bf16 %v1398, %v1455
        %v1490 = vadd.bf16 %v1399, %v1459
        %v1491 = vadd.bf16 %v1400, %v1463
        %v1492 = vadd.bf16 %v1401, %v1467
        %v1493 = vadd.bf16 %v1402, %v1471
        %v1494 = vadd.bf16 %v1403, %v1475
        %v1495 = vadd.bf16 %v1404, %v1479
        %v1496 = vunpack.c.l.bf16 %v1488
        %v1497 = vunpack.c.l.bf16 %v1489
        %v1498 = vunpack.c.l.bf16 %v1490
        %v1499 = vunpack.c.l.bf16 %v1491
        %v1500 = vunpack.c.l.bf16 %v1492
        %v1501 = vunpack.c.l.bf16 %v1493
        %v1502 = vunpack.c.l.bf16 %v1494
        %v1503 = vunpack.c.l.bf16 %v1495
        %v1504 = vld [vmem:[%s4] sm:$0x1]
        %v1506 = vlaneseq
        %v1507 = vshrl.u32 %v1506, 7
        %v1508 = vsub.s32 0, %v1507
        %v1509 = vrot.slane %v1504, %v1508
        %v1511 = vadd.f32 %v1496, %v1509
        %v1512 = vadd.f32 %v1497, %v1509
        %v1513 = vadd.f32 %v1498, %v1509
        %v1514 = vadd.f32 %v1499, %v1509
        %v1515 = vadd.f32 %v1500, %v1509
        %v1516 = vadd.f32 %v1501, %v1509
        %v1517 = vadd.f32 %v1502, %v1509
        %v1518 = vadd.f32 %v1503, %v1509
        %v1519 = vmax.f32 %v1511, 0.0
        %v1520 = vmax.f32 %v1512, 0.0
        %v1521 = vmax.f32 %v1513, 0.0
        %v1522 = vmax.f32 %v1514, 0.0
        %v1523 = vmax.f32 %v1515, 0.0
        %v1524 = vmax.f32 %v1516, 0.0
        %v1525 = vmax.f32 %v1517, 0.0
        %v1526 = vmax.f32 %v1518, 0.0
        %v1527 = vmin.f32 %v1519, 6.0
        %v1528 = vmin.f32 %v1520, 6.0
        %v1529 = vmin.f32 %v1521, 6.0
        %v1530 = vmin.f32 %v1522, 6.0
        %v1531 = vmin.f32 %v1523, 6.0
        %v1532 = vmin.f32 %v1524, 6.0
        %v1533 = vmin.f32 %v1525, 6.0
        %v1534 = vmin.f32 %v1526, 6.0
        %v1535 = vpack.c.bf16 %v1528, %v1527
        %v1536 = vpack.c.bf16 %v1530, %v1529
        %v1537 = vpack.c.bf16 %v1532, %v1531
        %v1538 = vpack.c.bf16 %v1534, %v1533
        %v1539 = vld [vmem:[%s5] sm:$0xf]
        %v1540 = vld [vmem:[%s5 + $0x4] sm:$0xf]
        %v1541 = vld [vmem:[%s5 + $0x8] sm:$0xf]
        %v1542 = vld [vmem:[%s5 + $0xc] sm:$0xf]
        %v1543 = vld [vmem:[%s5 + $0x10] sm:$0xf]
        %v1544 = vld [vmem:[%s5 + $0x14] sm:$0xf]
        %v1545 = vld [vmem:[%s5 + $0x18] sm:$0xf]
        %v1546 = vld [vmem:[%s5 + $0x1c] sm:$0xf]
        %v1547 = vld [vmem:[%s5 + $0x20] sm:$0xf]
        %v1548 = vld [vmem:[%s5 + $0x24] sm:$0xf]
        %v1549 = vld [vmem:[%s5 + $0x28] sm:$0xf]
        %v1550 = vld [vmem:[%s5 + $0x2c] sm:$0xf]
        %v1551 = vld [vmem:[%s5 + $0x30] sm:$0xf]
        %v1552 = vld [vmem:[%s5 + $0x34] sm:$0xf]
        %v1553 = vld [vmem:[%s5 + $0x38] sm:$0xf]
        %v1554 = vld [vmem:[%s5 + $0x3c] sm:$0xf]
        %v1555 = vld [vmem:[%s6] sm:$0x1]
        %v1557 = vlaneseq
        %v1558 = vshrl.u32 %v1557, 7
        %v1559 = vsub.s32 0, %v1558
        %v1560 = vrot.slane %v1555, %v1559
        %v1578 = vunpack.c.l.b16 %v1539
        %v1579 = vunpack.c.l.b16 %v1540
        %v1580 = vunpack.c.l.b16 %v1541
        %v1581 = vunpack.c.l.b16 %v1542
        %v1582 = vunpack.c.l.b16 %v1543
        %v1583 = vunpack.c.l.b16 %v1544
        %v1584 = vunpack.c.l.b16 %v1545
        %v1585 = vunpack.c.l.b16 %v1546
        %v1586 = vunpack.c.l.b16 %v1547
        %v1587 = vunpack.c.l.b16 %v1548
        %v1588 = vunpack.c.l.b16 %v1549
        %v1589 = vunpack.c.l.b16 %v1550
        %v1590 = vunpack.c.l.b16 %v1551
        %v1591 = vunpack.c.l.b16 %v1552
        %v1592 = vunpack.c.l.b16 %v1553
        %v1593 = vunpack.c.l.b16 %v1554
        %v1594 = vpack.c.b16 %v1579, %v1578
        %v1595 = vpack.c.b16 %v1581, %v1580
        %v1596 = vpack.c.b16 %v1583, %v1582
        %v1597 = vpack.c.b16 %v1585, %v1584
        %v1598 = vpack.c.b16 %v1587, %v1586
        %v1599 = vpack.c.b16 %v1589, %v1588
        %v1600 = vpack.c.b16 %v1591, %v1590
        %v1601 = vpack.c.b16 %v1593, %v1592
        %1610 = vmatprep.subr.bf16.mxu0 0
        %1611 = vmatpush1.bf16.msra.mxu0 %v1594
        %1612 = vmatprep.subr.bf16.mxu0 0
        %1613 = vmatpush1.bf16.msra.mxu0 %v1595
        %1614 = vmatprep.subr.bf16.mxu0 0
        %1615 = vmatpush1.bf16.msra.mxu0 %v1596
        %1616 = vmatprep.subr.bf16.mxu0 0
        %1617 = vmatpush1.bf16.msra.mxu0 %v1597
        %1618 = vmatprep.subr.bf16.mxu0 0
        %1619 = vmatpush1.bf16.msra.mxu0 %v1598
        %1620 = vmatprep.subr.bf16.mxu0 0
        %1621 = vmatpush1.bf16.msra.mxu0 %v1599
        %1622 = vmatprep.subr.bf16.mxu0 0
        %1623 = vmatpush1.bf16.msra.mxu0 %v1600
        %1624 = vmatprep.subr.bf16.mxu0 0
        %1625 = vmatpush1.bf16.msra.mxu0 %v1601
        %1626 = vmatprep.subr.bf16.mxu0 0
        %1627 = vmatpush1.bf16.msra.mxu0 0
        %1628 = vmatprep.subr.bf16.mxu0 0
        %1629 = vmatpush1.bf16.msra.mxu0 0
        %1630 = vmatprep.subr.bf16.mxu0 0
        %1631 = vmatpush1.bf16.msra.mxu0 0
        %1632 = vmatprep.subr.bf16.mxu0 0
        %1633 = vmatpush1.bf16.msra.mxu0 0
        %1634 = vmatprep.subr.bf16.mxu0 0
        %1635 = vmatpush1.bf16.msra.mxu0 0
        %1636 = vmatprep.subr.bf16.mxu0 0
        %1637 = vmatpush1.bf16.msra.mxu0 0
        %1638 = vmatprep.subr.bf16.mxu0 0
        %1639 = vmatpush1.bf16.msra.mxu0 0
        %1640 = vmatprep.subr.bf16.mxu0 0
        %1641 = vmatpush1.bf16.msra.mxu0 0
        %1642 = vmatprep.mubr.bf16.mxu0 0
        %1643 = vmatmul.mubr.bf16.gmra.mrb[0].mxu0 %v1535
        %v1644 = vpop.f32.mrb[0].mxu0
        %v1645 = vadd.f32 %v1560, %v1644
        %v1646 = vpop.f32.mrb[0].mxu0
        %v1647 = vpop.f32.mrb[0].mxu0
        %v1648 = vadd.f32 %v1560, %v1647
        %v1649 = vpop.f32.mrb[0].mxu0
        %1650 = vmatprep.mubr.bf16.mxu0 0
        %1651 = vmatmul.mubr.bf16.gmra.mrb[0].mxu0 %v1536
        %v1652 = vpop.f32.mrb[0].mxu0
        %v1653 = vadd.f32 %v1560, %v1652
        %v1654 = vpop.f32.mrb[0].mxu0
        %v1655 = vpop.f32.mrb[0].mxu0
        %v1656 = vadd.f32 %v1560, %v1655
        %v1657 = vpop.f32.mrb[0].mxu0
        %1658 = vmatprep.mubr.bf16.mxu0 0
        %1659 = vmatmul.mubr.bf16.gmra.mrb[0].mxu0 %v1537
        %v1660 = vpop.f32.mrb[0].mxu0
        %v1661 = vadd.f32 %v1560, %v1660
        %v1662 = vpop.f32.mrb[0].mxu0
        %v1663 = vpop.f32.mrb[0].mxu0
        %v1664 = vadd.f32 %v1560, %v1663
        %v1665 = vpop.f32.mrb[0].mxu0
        %1666 = vmatprep.mubr.bf16.mxu0 0
        %1667 = vmatmul.mubr.bf16.gmra.mrb[0].mxu0 %v1538
        %v1668 = vpop.f32.mrb[0].mxu0
        %v1669 = vadd.f32 %v1560, %v1668
        %v1670 = vpop.f32.mrb[0].mxu0
        %v1671 = vpop.f32.mrb[0].mxu0
        %v1672 = vadd.f32 %v1560, %v1671
        %v1673 = vpop.f32.mrb[0].mxu0
        %1674 = vdwg.mxu0
        %v1675 = vld [vmem:[%s266] sm:$0xff]
        %v1676 = vld [vmem:[%s266 + $0x8] sm:$0xff]
        %v1677 = vld [vmem:[%s266 + $0x10] sm:$0xff]
        %v1678 = vld [vmem:[%s266 + $0x18] sm:$0xff]
        %v1679 = vld [vmem:[%s266 + $0x20] sm:$0xff]
        %v1680 = vld [vmem:[%s266 + $0x28] sm:$0xff]
        %v1681 = vld [vmem:[%s266 + $0x30] sm:$0xff]
        %v1682 = vld [vmem:[%s266 + $0x38] sm:$0xff]
        %v1683 = vadd.f32 %v1645, %v1675
        %v1684 = vadd.f32 %v1648, %v1676
        %v1685 = vadd.f32 %v1653, %v1677
        %v1686 = vadd.f32 %v1656, %v1678
        %v1687 = vadd.f32 %v1661, %v1679
        %v1688 = vadd.f32 %v1664, %v1680
        %v1689 = vadd.f32 %v1669, %v1681
        %v1690 = vadd.f32 %v1672, %v1682
        %1691 = vst.msk [vmem:[%s296] sm:$0xff] %vm377, %v1683
        %1692 = vst.msk [vmem:[%s296 + $0x8] sm:$0xff] %vm377, %v1684
        %1693 = vst.msk [vmem:[%s296 + $0x10] sm:$0xff] %vm377, %v1685
        %1694 = vst.msk [vmem:[%s296 + $0x18] sm:$0xff] %vm377, %v1686
        %1695 = vst.msk [vmem:[%s296 + $0x20] sm:$0xff] %vm377, %v1687
        %1696 = vst.msk [vmem:[%s296 + $0x28] sm:$0xff] %vm377, %v1688
        %1697 = vst.msk [vmem:[%s296 + $0x30] sm:$0xff] %vm377, %v1689
        %1698 = vst.msk [vmem:[%s296 + $0x38] sm:$0xff] %vm377, %v1690
        %s1699 = sand.u32 %s184, 1
        %s1700 = scalar_lea.sflag [#allocation5], %s1699
        %s1701 = sand.u32 %s184, 1
        %s1702 = smul.addr %s1701, 64
        %s1703 = scalar_lea.vmem [#allocation6], %s1702
        // Predicated region
        $region53: #{tpu_custom_call.1} parent=47 // pred_check
          %p1704 = pneg %p194
        $region54: #{tpu_custom_call.1} parent=47 // pred_check_branch
          %1706 = sbr.rel (%p1704) target = $region56
        $region55: #{tpu_custom_call.1} parent=47 // pred_region
          %s1708 = ssub.s32 1024, 1024
          %1709 = vsyncadd %s1700, %s1708
          %s1710 = smul.addr %s24, 8
          %s1711 = smul.addr %s1710, 128
          %s1712 = scalar_lea.hbm %s7, %s1711
          %s1713 = sshll.u32 %s1703, 4
          %s1714 = int_to_ptr.vmem [resolvable:$true] %s1713
          %1719 = dma.vmem_to_hbm [thread:$0]  %s1714, 1024, %s1712, %s1700, 128, 128, 8
        $region56: #{tpu_custom_call.1} parent=47 // pred_fallthru
          _
      $region48: #{tpu_custom_call.1} parent=5 // pred_fallthru
        _
      %p1720 = scmp.le.s32.totalorder 2, %s19
      // Predicated region
      $region57: #{tpu_custom_call.1} parent=5 // pred_check
        %p1721 = pneg %p1720
      $region58: #{tpu_custom_call.1} parent=5 // pred_check_branch
        %1723 = sbr.rel (%p1721) target = $region60
      $region59: #{tpu_custom_call.1} parent=5 // pred_region
        %s1724 = ssub.s32 %s19, 2
        // Predicated region
        $region61: #{tpu_custom_call.1} parent=59 // pred_check
          %p1725 = pneg %p200
        $region62: #{tpu_custom_call.1} parent=59 // pred_check_branch
          %1727 = sbr.rel (%p1725) target = $region64
        $region63: #{tpu_custom_call.1} parent=59 // pred_region
          %s1728 = sand.u32 %s185, 1
          %s1729 = scalar_lea.sflag [#allocation5], %s1728
          %s1730 = sand.u32 %s185, 1
          %s1731 = smul.addr %s1730, 64
          %s1732 = scalar_lea.vmem [#allocation6], %s1731
          %1733 = dma.done %s1729, 1024
        $region64: #{tpu_custom_call.1} parent=59 // pred_fallthru
          _
      $region60: #{tpu_custom_call.1} parent=5 // pred_fallthru
        _
    $region6: #{tpu_custom_call.1} parent=1 // loop_footer
      %s23 = sadd.s32 1, %s19
    $region7: #{tpu_custom_call.1} parent=1 // loop_footer_branch
      %18 = sbr.rel target = $region3
    $region8: #{tpu_custom_call.1} parent=1 // loop_exit
      _
    %1734 = vsyncpa [#allocation4], 1
    %s1735 = scalar_lea.sflag [#allocation4], 1
    %1736 = vsyncpa %s1735, 1
    %1737 = vsyncpa [#allocation5], 1
    %s1738 = scalar_lea.sflag [#allocation5], 1
    %1739 = vsyncpa %s1738, 1

</llo_original>
